<compile_context>
chip_gen: v6e
topology: v6e:2x2x1
jax: 0.10.0
libtpu: 0.0.40
codegen_flags: <defaults>
</compile_context>

<pallas_src>
import jax
import jax.numpy as jnp
from jax.experimental import pallas as pl
from jax.experimental.pallas import tpu as pltpu

# x2act parameters (deterministic init from x2act_module: weight=[0.005, 1], bias=[0])
X2_W0 = 0.005
X2_W1 = 1.0
X2_B = 0.0          # bias is 0 in the module; folded away in the kernel epilogues
BN_EPS = 1e-5


def fold_bn(gamma, beta, mean, var):
    scale = gamma / jnp.sqrt(var + BN_EPS)
    shift = beta - mean * scale
    return scale, shift


# ------------------------------ fused kernel -------------------------------- #

def _make_st_gcn_kernel(rows, T, CV, kt, pad):
    """Fused st_gcn kernel for one (rows = B*T, CV) lane-dense block."""
    bf16 = jnp.bfloat16

    def kernel(x_ref, wcomb_ref, wt_ref, lp_ref, o_ref):
        x = x_ref[...]                                # (rows, CV) f32; also the residual
        lp = lp_ref[...]                              # (4, CV) folded BN/bias lanes
        s1, sh1 = lp[0:1, :], lp[1:2, :]
        s2, sh2 = lp[2:3, :], lp[3:4, :]

        # --- gcn 1x1 conv + graph aggregation fused into one lane-dense matmul ---
        # bf16 MXU operands, f32 accumulation.
        y = jnp.dot(x.astype(bf16), wcomb_ref[...],
                    preferred_element_type=jnp.float32)

        # --- BN1 (gcn bias folded into shift) + x2act (f32 on the VPU) ---
        u = y * s1 + sh1
        z = u * (X2_W0 * u + X2_W1)                   # x2act, zero bias dropped
        zb = z.astype(bf16)

        # --- temporal (kt, 1) conv, 'same' zero padding along t ---
        # p_dt = z @ Wt[dt] on the aligned activation; shift the tap OUTPUTS
        # along the sublane (row) axis with pltpu.roll and zero-mask rows that
        # would cross a sample boundary (row-within-sample index ti = row % T).
        ti = jax.lax.broadcasted_iota(jnp.int32, (rows, 1), 0) % T
        acc = None
        for dt in range(kt):                          # static unroll
            p = jnp.dot(zb, wt_ref[dt], preferred_element_type=jnp.float32)
            shift = pad - dt                          # out[t] += Wt[dt] applied to z[t - shift]
            if shift != 0:
                p = pltpu.roll(p, shift % rows, axis=0)
                mask = (ti >= shift) if shift > 0 else (ti < T + shift)
                p = jnp.where(mask, p, 0.0)
            acc = p if acc is None else acc + p

        # --- BN2 (conv bias folded) + Dropout(0) + identity residual + x2act ---
        v = acc * s2 + sh2 + x
        o_ref[...] = (v * (X2_W0 * v + X2_W1)).astype(o_ref.dtype)

    return kernel


# ------------------------------ st_gcn forward ------------------------------ #

def _pick_block_n(N, T, target_rows=256):
    """Largest divisor of N whose block stays <= target_rows rows, preferring a
    grid of >= 2 steps (keeps both v7x TensorCores busy)."""
    want = max(1, target_rows // T)
    if N >= 2:
        want = min(want, N // 2)
    best = 1
    for d in range(1, N + 1):
        if N % d == 0 and d <= want:
            best = d
    return best


def st_gcn_forward_canonical(x_l, A, params, kt, block_n=None):
    """st_gcn forward on the canonical lane layout.

    x_l: (N, T, Cin*V) with lane index = c*V + v.  Returns (out_l, A) in the
    same layout so stacked st_gcn blocks never leave it (no per-block HBM
    transposes)."""
    N, T, CinV = x_l.shape
    K, V, _ = A.shape
    C = params["w_gcn"].shape[0] // K                 # Cout
    Cin = params["w_gcn"].shape[1]
    assert Cin * V == CinV
    assert Cin == C, "identity-residual configuration requires Cin == Cout"
    CV = C * V
    pad = (kt - 1) // 2

    f32, bf16 = jnp.float32, jnp.bfloat16

    # ---- parameter-only folding (constant w.r.t. x; done once by XLA) ----
    # combined gcn-conv x graph-aggregation weight: (Cin*V, C*V)
    wg = params["w_gcn"].reshape(K, C, Cin).astype(f32)
    wcomb = jnp.einsum("kcx,kvw->xvcw", wg, A.astype(f32)).reshape(CinV, CV)
    bcomb = jnp.einsum("kc,kvw->cw", params["b_gcn"].reshape(K, C).astype(f32),
                       A.astype(f32)).reshape(CV)

    s1, b1 = fold_bn(params["bn1_gamma"], params["bn1_beta"],
                     params["bn1_mean"], params["bn1_var"])
    s2, b2 = fold_bn(params["bn2_gamma"], params["bn2_beta"],
                     params["bn2_mean"], params["bn2_var"])
    s1_l = jnp.repeat(s1, V)
    sh1_l = s1_l * bcomb + jnp.repeat(b1, V)
    s2_l = jnp.repeat(s2, V)
    sh2_l = s2_l * jnp.repeat(params["b_tcn"], V) + jnp.repeat(b2, V)
    lane_params = jnp.stack([s1_l, sh1_l, s2_l, sh2_l]).astype(f32)        # (4, CV)

    # temporal conv taps expanded to keep lanes = c*V + v:
    # wt_exp[dt, ci*V + w, co*V + w'] = w_tcn[co, ci, dt] * delta(w, w')
    # TODO(synk): for real ST-GCN sizes (e.g. C=64, V=25) this identity-expanded
    #             MXU form (93.75% structural zeros here) does not scale; use
    #             per-channel VPU FMAs or a C-lane relayout for the taps.
    eyeV = jnp.eye(V, dtype=f32)
    wt_exp = jnp.einsum("oit,vw->tivow", params["w_tcn"].astype(f32),
                        eyeV).reshape(kt, CinV, CV).astype(bf16)
    wcomb = wcomb.astype(bf16)

    # ---- grid / block choice: B samples -> (B*T, CV) lane-dense rows per step ----
    B = _pick_block_n(N, T) if block_n is None else block_n
    assert N % B == 0
    rows = B * T
    assert rows % 8 == 0 or rows == N * T, "block rows must be sublane-aligned"

    x2d = x_l.reshape(N * T, CinV).astype(f32)

    flops = 2 * (N * T) * CinV * CV * (1 + kt) + 12 * (N * T) * CV
    bytes_accessed = (x2d.size + N * T * CV + lane_params.size) * 4 \
        + (wcomb.size + wt_exp.size) * 2

    kernel = _make_st_gcn_kernel(rows, T, CV, kt, pad)
    out2d = pl.pallas_call(
        kernel,
        out_shape=jax.ShapeDtypeStruct((N * T, CV), f32),
        grid_spec=pltpu.PrefetchScalarGridSpec(
            num_scalar_prefetch=0,
            grid=(N // B,),
            in_specs=[
                pl.BlockSpec((rows, CinV), lambda i: (i, 0)),        # x rows (also residual)
                pl.BlockSpec((CinV, CV), lambda i: (0, 0)),          # fused gcn weight (bf16)
                pl.BlockSpec((kt, CinV, CV), lambda i: (0, 0, 0)),   # temporal taps (bf16)
                pl.BlockSpec((4, CV), lambda i: (0, 0)),             # folded BN/bias lanes
            ],
            out_specs=pl.BlockSpec((rows, CV), lambda i: (i, 0)),
        ),
        compiler_params=pltpu.CompilerParams(
            dimension_semantics=("parallel",),
        ),
        cost_estimate=pl.CostEstimate(flops=flops, transcendentals=0,
                                      bytes_accessed=bytes_accessed),
    )(x2d, wcomb, wt_exp, lane_params)

    return out2d.reshape(N, T, CV), A


def st_gcn_forward(x, A, params, kt, block_n=None):
    """(N, Cin, T, V) interface matching the PyTorch module.  The layout
    transposes are paid only here (entry/exit); use st_gcn_forward_canonical
    directly when stacking blocks."""
    N, Cin, T, V = x.shape
    x_l = jnp.transpose(x, (0, 2, 1, 3)).reshape(N, T, Cin * V)
    out_l, A = st_gcn_forward_canonical(x_l, A, params, kt, block_n)
    C = out_l.shape[-1] // V
    out = out_l.reshape(N, T, C, V).transpose(0, 2, 1, 3)                 # (N, C, T, V)
    return out, A


# ------------------------------ reference (jnp) ------------------------------ #

def st_gcn_reference(x, A, params, kt):
    N, Cin, T, V = x.shape
    K = A.shape[0]
    C = params["w_gcn"].shape[0] // K
    h = jnp.einsum("oc,nctv->notv", params["w_gcn"], x) + params["b_gcn"][None, :, None, None]
    h = h.reshape(N, K, C, T, V)
    y = jnp.einsum("nkctv,kvw->nctw", h, A)
    s1, b1 = fold_bn(params["bn1_gamma"], params["bn1_beta"],
                     params["bn1_mean"], params["bn1_var"])
    z = s1[None, :, None, None] * y + b1[None, :, None, None]
    z = X2_W0 * z * z + X2_W1 * z + X2_B
    pad = (kt - 1) // 2
    zp = jnp.pad(z, ((0, 0), (0, 0), (pad, pad), (0, 0)))
    tz = sum(jnp.einsum("oc,nctv->notv", params["w_tcn"][:, :, dt], zp[:, :, dt:dt + T])
             for dt in range(kt))
    tz = tz + params["b_tcn"][None, :, None, None]
    s2, b2 = fold_bn(params["bn2_gamma"], params["bn2_beta"],
                     params["bn2_mean"], params["bn2_var"])
    o = s2[None, :, None, None] * tz + b2[None, :, None, None] + x
    return X2_W0 * o * o + X2_W1 * o + X2_B


# ----------------------------------- main ----------------------------------- #

def init_params(key, Cin, Cout, K, kt):
    ks = jax.random.split(key, 8)
    return {
        "w_gcn": 0.1 * jax.random.normal(ks[0], (K * Cout, Cin), jnp.float32),
        "b_gcn": 0.1 * jax.random.normal(ks[1], (K * Cout,), jnp.float32),
        "w_tcn": 0.1 * jax.random.normal(ks[2], (Cout, Cout, kt), jnp.float32),
        "b_tcn": 0.1 * jax.random.normal(ks[3], (Cout,), jnp.float32),
        "bn1_gamma": 1.0 + 0.1 * jax.random.normal(ks[4], (Cout,), jnp.float32),
        "bn1_beta": 0.1 * jax.random.normal(ks[5], (Cout,), jnp.float32),
        "bn1_mean": jnp.zeros((Cout,), jnp.float32),
        "bn1_var": jnp.ones((Cout,), jnp.float32),
        "bn2_gamma": 1.0 + 0.1 * jax.random.normal(ks[6], (Cout,), jnp.float32),
        "bn2_beta": 0.1 * jax.random.normal(ks[7], (Cout,), jnp.float32),
        "bn2_mean": jnp.zeros((Cout,), jnp.float32),
        "bn2_var": jnp.ones((Cout,), jnp.float32),
    }


if __name__ == "__main__":
    # Shapes consistent with st_gcn: C=8, T=8, V=16 (C*V = 128 -> exactly
    # lane-dense), K=3 graph kernels, temporal kernel kt=3, stride=1,
    # residual=True.  N=32 so row-batching gives 128-row MXU blocks and a
    # 2-step parallel grid (B=16 picked automatically).
    N, Cin, Cout, T, V, K, kt = 32, 8, 8, 8, 16, 3, 3

    key = jax.random.PRNGKey(0)
    kx, ka, kp = jax.random.split(key, 3)
    x = 0.5 * jax.random.normal(kx, (N, Cin, T, V), jnp.float32)
    A = 0.2 * jax.random.normal(ka, (K, V, V), jnp.float32)
    params = init_params(kp, Cin, Cout, K, kt)

    out, A_out = st_gcn_forward(x, A, params, kt)
    out = jax.block_until_ready(out)
    assert out.shape == (N, Cout, T, V)
    assert A_out.shape == (K, V, V)

    with jax.default_matmul_precision("highest"):
        ref = jax.block_until_ready(st_gcn_reference(x, A, params, kt))
    err = float(jnp.max(jnp.abs(out - ref)))
    # Tolerance reflects the deliberate bf16 MXU operands (f32 accumulation);
    # observed max error is ~1e-3 range, well inside this bound.
    assert jnp.allclose(out, ref, rtol=3e-2, atol=3e-2), err

    print("KERNEL_OK")
</pallas_src>

<mosaic_0001>
module attributes {stable_mosaic.version = 11 : i64} {
  func.func @kernel(%arg0: i32, %arg1: memref<128x128xf32, #tpu.memory_space<vmem>>, %arg2: memref<128x128xbf16, #tpu.memory_space<vmem>>, %arg3: memref<3x128x128xbf16, #tpu.memory_space<vmem>>, %arg4: memref<4x128xf32, #tpu.memory_space<vmem>>, %arg5: memref<128x128xf32, #tpu.memory_space<vmem>>) attributes {dimension_semantics = [#tpu.dimension_semantics<parallel>], iteration_bounds = array<i64: 2>, scalar_prefetch = 0 : i64, scratch_operands = 0 : i64, tpu.core_type = #tpu.core_type<tc>, window_params = [{transform_indices = @transform_0, window_bounds = array<i64: 128, 128>}, {pipeline_mode = #tpu.pipeline_mode<synchronous>, transform_indices = @transform_1, window_bounds = array<i64: 128, 128>}, {pipeline_mode = #tpu.pipeline_mode<synchronous>, transform_indices = @transform_2, window_bounds = array<i64: 3, 128, 128>}, {pipeline_mode = #tpu.pipeline_mode<synchronous>, transform_indices = @transform_3, window_bounds = array<i64: 4, 128>}, {transform_indices = @transform_4, window_bounds = array<i64: 128, 128>}]} {
    %c0 = arith.constant 0 : index
    %c0_0 = arith.constant 0 : index
    %0 = vector.load %arg1[%c0, %c0_0] : memref<128x128xf32, #tpu.memory_space<vmem>>, vector<128x128xf32>
    %c0_1 = arith.constant 0 : index
    %c0_2 = arith.constant 0 : index
    %1 = vector.load %arg4[%c0_1, %c0_2] : memref<4x128xf32, #tpu.memory_space<vmem>>, vector<4x128xf32>
    %2 = vector.extract_strided_slice %1 {offsets = [0, 0], sizes = [1, 128], strides = [1, 1]} : vector<4x128xf32> to vector<1x128xf32>
    %3 = vector.extract_strided_slice %1 {offsets = [1, 0], sizes = [1, 128], strides = [1, 1]} : vector<4x128xf32> to vector<1x128xf32>
    %4 = vector.extract_strided_slice %1 {offsets = [2, 0], sizes = [1, 128], strides = [1, 1]} : vector<4x128xf32> to vector<1x128xf32>
    %5 = vector.extract_strided_slice %1 {offsets = [3, 0], sizes = [1, 128], strides = [1, 1]} : vector<4x128xf32> to vector<1x128xf32>
    %6 = arith.truncf %0 : vector<128x128xf32> to vector<128x128xbf16>
    %c0_3 = arith.constant 0 : index
    %c0_4 = arith.constant 0 : index
    %7 = vector.load %arg2[%c0_3, %c0_4] : memref<128x128xbf16, #tpu.memory_space<vmem>>, vector<128x128xbf16>
    %cst = arith.constant dense<0.000000e+00> : vector<128x128xf32>
    %8 = tpu.matmul %6, %7, %cst {dimension_numbers = #tpu.dot_dimension_numbers<[1], [0], [0], [1], [0, 0, 1, 1], [], []>} : vector<128x128xbf16>, vector<128x128xbf16>, vector<128x128xf32> -> vector<128x128xf32>
    %9 = vector.broadcast %2 : vector<1x128xf32> to vector<128x128xf32>
    %10 = arith.mulf %8, %9 : vector<128x128xf32>
    %11 = vector.broadcast %3 : vector<1x128xf32> to vector<128x128xf32>
    %12 = arith.addf %10, %11 : vector<128x128xf32>
    %cst_5 = arith.constant 5.000000e-03 : f32
    %13 = vector.broadcast %cst_5 : f32 to vector<128x128xf32>
    %14 = arith.mulf %13, %12 : vector<128x128xf32>
    %cst_6 = arith.constant 1.000000e+00 : f32
    %15 = vector.broadcast %cst_6 : f32 to vector<128x128xf32>
    %16 = arith.addf %14, %15 : vector<128x128xf32>
    %17 = arith.mulf %12, %16 : vector<128x128xf32>
    %18 = arith.truncf %17 : vector<128x128xf32> to vector<128x128xbf16>
    %19 = tpu.iota {dimensions = array<i32: 0>} : vector<128x1xi32>
    %c8_i32 = arith.constant 8 : i32
    %c0_i32 = arith.constant 0 : i32
    %20 = arith.cmpi eq, %c8_i32, %c0_i32 : i32
    %c1_i32 = arith.constant 1 : i32
    %21 = arith.select %20, %c1_i32, %c8_i32 : i32
    %22 = vector.broadcast %21 : i32 to vector<128x1xi32>
    %23 = arith.remsi %19, %22 : vector<128x1xi32>
    %c0_i32_7 = arith.constant 0 : i32
    %24 = vector.broadcast %c0_i32_7 : i32 to vector<128x1xi32>
    %25 = arith.cmpi ne, %23, %24 : vector<128x1xi32>
    %c0_i32_8 = arith.constant 0 : i32
    %26 = vector.broadcast %c0_i32_8 : i32 to vector<128x1xi32>
    %27 = arith.cmpi slt, %23, %26 : vector<128x1xi32>
    %c0_i32_9 = arith.constant 0 : i32
    %28 = arith.cmpi slt, %21, %c0_i32_9 : i32
    %29 = vector.broadcast %28 : i1 to vector<128x1xi1>
    %30 = vector.broadcast %29 : vector<128x1xi1> to vector<128x1xi1>
    %31 = arith.xori %27, %30 : vector<128x1xi1>
    %32 = arith.andi %31, %25 : vector<128x1xi1>
    %33 = vector.broadcast %21 : i32 to vector<128x1xi32>
    %34 = arith.addi %23, %33 : vector<128x1xi32>
    %35 = arith.select %32, %34, %23 : vector<128x1xi1>, vector<128x1xi32>
    %c0_10 = arith.constant 0 : index
    %c0_11 = arith.constant 0 : index
    %c0_12 = arith.constant 0 : index
    %36 = vector.load %arg3[%c0_10, %c0_11, %c0_12] : memref<3x128x128xbf16, #tpu.memory_space<vmem>>, vector<1x128x128xbf16>
    %37 = vector.shape_cast %36 : vector<1x128x128xbf16> to vector<128x128xbf16>
    %cst_13 = arith.constant dense<0.000000e+00> : vector<128x128xf32>
    %38 = tpu.matmul %18, %37, %cst_13 {dimension_numbers = #tpu.dot_dimension_numbers<[1], [0], [0], [1], [0, 0, 1, 1], [], []>} : vector<128x128xbf16>, vector<128x128xbf16>, vector<128x128xf32> -> vector<128x128xf32>
    %c1_i32_14 = arith.constant 1 : i32
    %39 = tpu.dynamic_rotate %38 by %c1_i32_14 dim 0 : vector<128x128xf32>, i32 -> vector<128x128xf32>
    %c1_i32_15 = arith.constant 1 : i32
    %40 = vector.broadcast %c1_i32_15 : i32 to vector<128x1xi32>
    %41 = arith.cmpi sge, %35, %40 : vector<128x1xi32>
    %cst_16 = arith.constant 0.000000e+00 : f32
    %42 = vector.shape_cast %41 : vector<128x1xi1> to vector<128x1xi1>
    %43 = vector.broadcast %42 : vector<128x1xi1> to vector<128x128xi1>
    %44 = vector.broadcast %cst_16 : f32 to vector<128x128xf32>
    %45 = arith.select %43, %39, %44 : vector<128x128xi1>, vector<128x128xf32>
    %c1 = arith.constant 1 : index
    %c0_17 = arith.constant 0 : index
    %c0_18 = arith.constant 0 : index
    %46 = vector.load %arg3[%c1, %c0_17, %c0_18] : memref<3x128x128xbf16, #tpu.memory_space<vmem>>, vector<1x128x128xbf16>
    %47 = vector.shape_cast %46 : vector<1x128x128xbf16> to vector<128x128xbf16>
    %cst_19 = arith.constant dense<0.000000e+00> : vector<128x128xf32>
    %48 = tpu.matmul %18, %47, %cst_19 {dimension_numbers = #tpu.dot_dimension_numbers<[1], [0], [0], [1], [0, 0, 1, 1], [], []>} : vector<128x128xbf16>, vector<128x128xbf16>, vector<128x128xf32> -> vector<128x128xf32>
    %49 = arith.addf %45, %48 : vector<128x128xf32>
    %c2 = arith.constant 2 : index
    %c0_20 = arith.constant 0 : index
    %c0_21 = arith.constant 0 : index
    %50 = vector.load %arg3[%c2, %c0_20, %c0_21] : memref<3x128x128xbf16, #tpu.memory_space<vmem>>, vector<1x128x128xbf16>
    %51 = vector.shape_cast %50 : vector<1x128x128xbf16> to vector<128x128xbf16>
    %cst_22 = arith.constant dense<0.000000e+00> : vector<128x128xf32>
    %52 = tpu.matmul %18, %51, %cst_22 {dimension_numbers = #tpu.dot_dimension_numbers<[1], [0], [0], [1], [0, 0, 1, 1], [], []>} : vector<128x128xbf16>, vector<128x128xbf16>, vector<128x128xf32> -> vector<128x128xf32>
    %c127_i32 = arith.constant 127 : i32
    %53 = tpu.dynamic_rotate %52 by %c127_i32 dim 0 : vector<128x128xf32>, i32 -> vector<128x128xf32>
    %c7_i32 = arith.constant 7 : i32
    %54 = vector.broadcast %c7_i32 : i32 to vector<128x1xi32>
    %55 = arith.cmpi slt, %35, %54 : vector<128x1xi32>
    %cst_23 = arith.constant 0.000000e+00 : f32
    %56 = vector.shape_cast %55 : vector<128x1xi1> to vector<128x1xi1>
    %57 = vector.broadcast %56 : vector<128x1xi1> to vector<128x128xi1>
    %58 = vector.broadcast %cst_23 : f32 to vector<128x128xf32>
    %59 = arith.select %57, %53, %58 : vector<128x128xi1>, vector<128x128xf32>
    %60 = arith.addf %49, %59 : vector<128x128xf32>
    %61 = vector.broadcast %4 : vector<1x128xf32> to vector<128x128xf32>
    %62 = arith.mulf %60, %61 : vector<128x128xf32>
    %63 = vector.broadcast %5 : vector<1x128xf32> to vector<128x128xf32>
    %64 = arith.addf %62, %63 : vector<128x128xf32>
    %65 = arith.addf %64, %0 : vector<128x128xf32>
    %cst_24 = arith.constant 5.000000e-03 : f32
    %66 = vector.broadcast %cst_24 : f32 to vector<128x128xf32>
    %67 = arith.mulf %66, %65 : vector<128x128xf32>
    %cst_25 = arith.constant 1.000000e+00 : f32
    %68 = vector.broadcast %cst_25 : f32 to vector<128x128xf32>
    %69 = arith.addf %67, %68 : vector<128x128xf32>
    %70 = arith.mulf %65, %69 : vector<128x128xf32>
    %c0_26 = arith.constant 0 : index
    %c0_27 = arith.constant 0 : index
    %71 = vector.load %arg5[%c0_26, %c0_27] : memref<128x128xf32, #tpu.memory_space<vmem>>, vector<128x128xf32>
    tpu.vector_store %arg5[%c0_26, %c0_27], %70 {strides = array<i32>} : memref<128x128xf32, #tpu.memory_space<vmem>>, vector<128x128xf32>,
    return
  }
  func.func @transform_0(%arg0: i32) -> (i32, i32) {
    %c0_i32 = arith.constant 0 : i32
    %c0_i32_0 = arith.constant 0 : i32
    return %arg0, %c0_i32 : i32, i32
  }
  func.func @transform_1(%arg0: i32) -> (i32, i32) {
    %c0_i32 = arith.constant 0 : i32
    %c0_i32_0 = arith.constant 0 : i32
    %c0_i32_1 = arith.constant 0 : i32
    return %c0_i32, %c0_i32_0 : i32, i32
  }
  func.func @transform_2(%arg0: i32) -> (i32, i32, i32) {
    %c0_i32 = arith.constant 0 : i32
    %c0_i32_0 = arith.constant 0 : i32
    %c0_i32_1 = arith.constant 0 : i32
    %c0_i32_2 = arith.constant 0 : i32
    return %c0_i32, %c0_i32_0, %c0_i32_1 : i32, i32, i32
  }
  func.func @transform_3(%arg0: i32) -> (i32, i32) {
    %c0_i32 = arith.constant 0 : i32
    %c0_i32_0 = arith.constant 0 : i32
    %c0_i32_1 = arith.constant 0 : i32
    return %c0_i32, %c0_i32_0 : i32, i32
  }
  func.func @transform_4(%arg0: i32) -> (i32, i32) {
    %c0_i32 = arith.constant 0 : i32
    %c0_i32_0 = arith.constant 0 : i32
    return %arg0, %c0_i32 : i32, i32
  }
}

</mosaic_0001>

<llo_original>
// kernel: tpu_custom_call.1
$region0: #{tpu_custom_call.1}
  #allocation0 [shape = 'u32[]', space=smem, size = 0x4, offset = 0x4, fixed_abs, tag = 'smem constant byte address 0x4 - core index']
  #allocation1 [shape = 'u32[144,128]{1,0:T(1,128)}', space=vmem, size = 0x12000, scoped, tag = 'internal scratch']
  %s0 = inlined_call_operand.hbm [shape: f32[256,128], index: 0, kind: input, shape index: {}]
  %s1 = inlined_call_operand.hbm [shape: bf16[128,128], index: 1, kind: input, shape index: {}]
  %s2 = inlined_call_operand.hbm [shape: bf16[3,128,128], index: 2, kind: input, shape index: {}]
  %s3 = inlined_call_operand.vmem [shape: f32[4,128], index: 3, kind: input, shape index: {}]
  %s4 = inlined_call_operand.hbm [shape: f32[256,128], index: 4, kind: output, shape index: {}]
  %s5 = sld [smem:[#allocation0]]
  $region61: #{tpu_custom_call.1} parent=0
    _
  %s7 = ssub.s32 1, %s5
  %s8 = scalar_select 0, %s7, %s5
  $region1: #{tpu_custom_call.1} parent=0
    #allocation2 [shape = 'u8[131072]{0}', space=vmem, size = 0x20000, scoped, tag = 'input window, operand 0']
    #allocation3 [shape = 's32[2]{0}', space=sflag, size = 0x8, scoped, tag = 'scoped memory for tpu_custom_call.1']
    #allocation4 [shape = 's32[2]{0}', space=sflag, size = 0x8, scoped, tag = 'scoped memory for tpu_custom_call.1']
    #allocation5 [shape = 'u8[32768]{0}', space=vmem, size = 0x8000, scoped, tag = 'input window, operand 1, single buffered']
    #allocation6 [shape = 's32[1]{0}', space=sflag, size = 0x4, scoped, tag = 'scoped memory for tpu_custom_call.1']
    #allocation7 [shape = 'u8[98304]{0}', space=vmem, size = 0x18000, scoped, tag = 'input window, operand 2, single buffered']
    #allocation8 [shape = 'u8[131072]{0}', space=vmem, size = 0x20000, scoped, tag = 'output window, operand 0']
    %9 = vsyncpa [#allocation3], 0
    %s10 = scalar_lea.sflag [#allocation3], 1
    %11 = vsyncpa %s10, 0
    %12 = vsyncpa [#allocation6], 0
    %13 = vsyncpa [#allocation4], 0
    %s14 = scalar_lea.sflag [#allocation4], 1
    %15 = vsyncpa %s14, 0
    loop: start=0, step=1, limit=4
    $region2: #{tpu_custom_call.1} parent=1 // loop_pre_header
      _
    $region3: #{tpu_custom_call.1} parent=1 // loop_header
      %s17 = sphi 0, %s21
      %p18 = scmp.ge.s32.totalorder %s17, 4
      %s27 = sphi 0, %s29
      %s30 = sphi 0, %s27
      %s31 = sphi 0, %s30
      %s47 = sphi 0, %s31
      %s51 = sphi 0, %s51
      %s53 = sphi 0, %s51
      %s54 = sphi 0, %s53
      %s68 = sphi 0, %s54
      %s72 = sphi 0, %s72
      %s74 = sphi 0, %s72
      %s75 = sphi 0, %s74
      %s89 = sphi 0, %s75
      %s93 = sphi 0, %s93
      %s95 = sphi 0, %s93
      %s96 = sphi 0, %s95
      %s110 = sphi 0, %s96
      %s116 = sphi 0, %s118
      %s119 = sphi 0, %s116
      %s120 = sphi 0, %s119
      %s136 = sphi 0, %s120
    $region4: #{tpu_custom_call.1} parent=1 // loop_header_branch
      %20 = sbr.rel (%p18) target = $region8
    $region5: #{tpu_custom_call.1} parent=1 // loop_body
      %s22 = ssub.s32 %s17, 1
      %s23 = ssub.s32 %s17, 2
      %s24 = sadd.s32 %s17, 1
      %s25 = ssub.s32 %s17, %s24
      %p26 = scmp.eq.s32.totalorder %s25, 0
      %s28 = sadd.s32 %s27, 1
      %s29 = scalar_select %p26, %s27, %s28
      %p32 = pneg %p26
      %p33 = scmp.eq.s32.totalorder %s17, 1
      %p34 = por %p32, %p33
      %p35 = scmp.ne.s32.totalorder %s27, %s30
      %p36 = scmp.eq.s32.totalorder %s17, 0
      %p37 = por %p35, %p36
      %p38 = scmp.ne.s32.totalorder %s27, %s30
      %p39 = scmp.eq.s32.totalorder %s22, 1
      %p40 = por %p38, %p39
      %p41 = scmp.ne.s32.totalorder %s30, %s31
      %p42 = scmp.eq.s32.totalorder %s22, 0
      %p43 = por %p41, %p42
      %p44 = scmp.ne.s32.totalorder %s30, %s31
      %p45 = scmp.eq.s32.totalorder %s23, 1
      %p46 = por %p44, %p45
      %p48 = scmp.ne.s32.totalorder %s31, %s47
      %p49 = scmp.eq.s32.totalorder %s23, 0
      %p50 = por %p48, %p49
      %s52 = sadd.s32 %s51, 1
      %p55 = scmp.eq.s32.totalorder %s17, 1
      %p56 = scmp.ne.s32.totalorder %s51, %s53
      %p57 = scmp.eq.s32.totalorder %s17, 0
      %p58 = por %p56, %p57
      %p59 = scmp.ne.s32.totalorder %s51, %s53
      %p60 = scmp.eq.s32.totalorder %s22, 1
      %p61 = por %p59, %p60
      %p62 = scmp.ne.s32.totalorder %s53, %s54
      %p63 = scmp.eq.s32.totalorder %s22, 0
      %p64 = por %p62, %p63
      %p65 = scmp.ne.s32.totalorder %s53, %s54
      %p66 = scmp.eq.s32.totalorder %s23, 1
      %p67 = por %p65, %p66
      %p69 = scmp.ne.s32.totalorder %s54, %s68
      %p70 = scmp.eq.s32.totalorder %s23, 0
      %p71 = por %p69, %p70
      %s73 = sadd.s32 %s72, 1
      %p76 = scmp.eq.s32.totalorder %s17, 1
      %p77 = scmp.ne.s32.totalorder %s72, %s74
      %p78 = scmp.eq.s32.totalorder %s17, 0
      %p79 = por %p77, %p78
      %p80 = scmp.ne.s32.totalorder %s72, %s74
      %p81 = scmp.eq.s32.totalorder %s22, 1
      %p82 = por %p80, %p81
      %p83 = scmp.ne.s32.totalorder %s74, %s75
      %p84 = scmp.eq.s32.totalorder %s22, 0
      %p85 = por %p83, %p84
      %p86 = scmp.ne.s32.totalorder %s74, %s75
      %p87 = scmp.eq.s32.totalorder %s23, 1
      %p88 = por %p86, %p87
      %p90 = scmp.ne.s32.totalorder %s75, %s89
      %p91 = scmp.eq.s32.totalorder %s23, 0
      %p92 = por %p90, %p91
      %s94 = sadd.s32 %s93, 1
      %p97 = scmp.eq.s32.totalorder %s17, 1
      %p98 = scmp.ne.s32.totalorder %s93, %s95
      %p99 = scmp.eq.s32.totalorder %s17, 0
      %p100 = por %p98, %p99
      %p101 = scmp.ne.s32.totalorder %s93, %s95
      %p102 = scmp.eq.s32.totalorder %s22, 1
      %p103 = por %p101, %p102
      %p104 = scmp.ne.s32.totalorder %s95, %s96
      %p105 = scmp.eq.s32.totalorder %s22, 0
      %p106 = por %p104, %p105
      %p107 = scmp.ne.s32.totalorder %s95, %s96
      %p108 = scmp.eq.s32.totalorder %s23, 1
      %p109 = por %p107, %p108
      %p111 = scmp.ne.s32.totalorder %s96, %s110
      %p112 = scmp.eq.s32.totalorder %s23, 0
      %p113 = por %p111, %p112
      %s114 = ssub.s32 %s17, %s24
      %p115 = scmp.eq.s32.totalorder %s114, 0
      %s117 = sadd.s32 %s116, 1
      %s118 = scalar_select %p115, %s116, %s117
      %p121 = pneg %p115
      %p122 = scmp.eq.s32.totalorder %s17, 1
      %p123 = por %p121, %p122
      %p124 = scmp.ne.s32.totalorder %s116, %s119
      %p125 = scmp.eq.s32.totalorder %s17, 0
      %p126 = por %p124, %p125
      %p127 = scmp.ne.s32.totalorder %s116, %s119
      %p128 = scmp.eq.s32.totalorder %s22, 1
      %p129 = por %p127, %p128
      %p130 = scmp.ne.s32.totalorder %s119, %s120
      %p131 = scmp.eq.s32.totalorder %s22, 0
      %p132 = por %p130, %p131
      %p133 = scmp.ne.s32.totalorder %s119, %s120
      %p134 = scmp.eq.s32.totalorder %s23, 1
      %p135 = por %p133, %p134
      %p137 = scmp.ne.s32.totalorder %s120, %s136
      %p138 = scmp.eq.s32.totalorder %s23, 0
      %p139 = por %p137, %p138
      %p140 = scmp.le.s32.totalorder 1, %s17
      %p141 = scmp.lt.s32.totalorder %s17, 3
      %p142 = pnand %p140, %p141
      %p143 = pneg %p142
      // Predicated region
      $region9: #{tpu_custom_call.1} parent=5 // pred_check
        _
      $region10: #{tpu_custom_call.1} parent=5 // pred_check_branch
        %145 = sbr.rel (%p142) target = $region12
      $region11: #{tpu_custom_call.1} parent=5 // pred_region
        %s146 = ssub.s32 %s17, 1
        // Predicated region
        $region13: #{tpu_custom_call.1} parent=11 // pred_check
          %p147 = pneg %p64
        $region14: #{tpu_custom_call.1} parent=11 // pred_check_branch
          %149 = sbr.rel (%p147) target = $region16
        $region15: #{tpu_custom_call.1} parent=11 // pred_region
          %s151 = ssub.s32 1024, 1024
          %152 = vsyncadd [#allocation6], %s151
          %s153 = sshll.u32 [#allocation5], 4
          %s154 = int_to_ptr.vmem [resolvable:$true] %s153
          %159 = dma.hbm_to_vmem [thread:$0]  %s1, 1024, %s154, [#allocation6], 64, 64, 4
        $region16: #{tpu_custom_call.1} parent=11 // pred_fallthru
          _
        // Predicated region
        $region17: #{tpu_custom_call.1} parent=11 // pred_check
          %p160 = pneg %p85
        $region18: #{tpu_custom_call.1} parent=11 // pred_check_branch
          %162 = sbr.rel (%p160) target = $region20
        $region19: #{tpu_custom_call.1} parent=11 // pred_region
          %s164 = ssub.s32 3072, 3072
          %165 = vsyncadd [#allocation6], %s164
          %s166 = sshll.u32 [#allocation7], 4
          %s167 = int_to_ptr.vmem [resolvable:$true] %s166
          %172 = dma.hbm_to_vmem [thread:$0]  %s2, 3072, %s167, [#allocation6], 64, 64, 4
        $region20: #{tpu_custom_call.1} parent=11 // pred_fallthru
          _
        // Predicated region
        $region21: #{tpu_custom_call.1} parent=11 // pred_check
          %p173 = pneg %p106
        $region22: #{tpu_custom_call.1} parent=11 // pred_check_branch
          %175 = sbr.rel (%p173) target = $region24
        $region23: #{tpu_custom_call.1} parent=11 // pred_region
          _
        $region24: #{tpu_custom_call.1} parent=11 // pred_fallthru
          _
      $region12: #{tpu_custom_call.1} parent=5 // pred_fallthru
        _
      %p176 = scmp.lt.s32.totalorder %s17, 2
      // Predicated region
      $region25: #{tpu_custom_call.1} parent=5 // pred_check
        %p177 = pneg %p176
      $region26: #{tpu_custom_call.1} parent=5 // pred_check_branch
        %179 = sbr.rel (%p177) target = $region28
      $region27: #{tpu_custom_call.1} parent=5 // pred_region
        // Predicated region
        $region29: #{tpu_custom_call.1} parent=27 // pred_check
          %p180 = pneg %p37
        $region30: #{tpu_custom_call.1} parent=27 // pred_check_branch
          %182 = sbr.rel (%p180) target = $region32
        $region31: #{tpu_custom_call.1} parent=27 // pred_region
          %s183 = sand.u32 %s27, 1
          %s184 = scalar_lea.sflag [#allocation3], %s183
          %s185 = sand.u32 %s27, 1
          %s186 = smul.addr %s185, 128
          %s187 = scalar_lea.vmem [#allocation2], %s186
          %s188 = smul.u32 16, %s17
          %s190 = ssub.s32 2048, 2048
          %191 = vsyncadd %s184, %s190
          %s192 = smul.addr %s188, 128
          %s193 = scalar_lea.hbm %s0, %s192
          %s194 = sshll.u32 %s187, 4
          %s195 = int_to_ptr.vmem [resolvable:$true] %s194
          %200 = dma.hbm_to_vmem [thread:$0]  %s193, 2048, %s195, %s184, 128, 128, 8
        $region32: #{tpu_custom_call.1} parent=27 // pred_fallthru
          _
      $region28: #{tpu_custom_call.1} parent=5 // pred_fallthru
        _
      %p201 = scmp.le.s32.totalorder 1, %s17
      %p202 = scmp.lt.s32.totalorder %s17, 3
      %p203 = pnand %p201, %p202
      %p204 = pneg %p203
      // Predicated region
      $region33: #{tpu_custom_call.1} parent=5 // pred_check
        _
      $region34: #{tpu_custom_call.1} parent=5 // pred_check_branch
        %206 = sbr.rel (%p203) target = $region36
      $region35: #{tpu_custom_call.1} parent=5 // pred_region
        %s207 = ssub.s32 %s17, 1
        %s208 = sand.u32 %s30, 1
        %s209 = scalar_lea.sflag [#allocation3], %s208
        %s210 = sand.u32 %s30, 1
        %s211 = smul.addr %s210, 128
        %s212 = scalar_lea.vmem [#allocation2], %s211
        // Predicated region
        $region37: #{tpu_custom_call.1} parent=35 // pred_check
          %p213 = pneg %p43
        $region38: #{tpu_custom_call.1} parent=35 // pred_check_branch
          %215 = sbr.rel (%p213) target = $region40
        $region39: #{tpu_custom_call.1} parent=35 // pred_region
          %216 = dma.done %s209, 2048
        $region40: #{tpu_custom_call.1} parent=35 // pred_fallthru
          _
        // Predicated region
        $region41: #{tpu_custom_call.1} parent=35 // pred_check
          %p217 = pneg %p64
        $region42: #{tpu_custom_call.1} parent=35 // pred_check_branch
          %219 = sbr.rel (%p217) target = $region44
        $region43: #{tpu_custom_call.1} parent=35 // pred_region
          %220 = dma.done [#allocation6], 1024
        $region44: #{tpu_custom_call.1} parent=35 // pred_fallthru
          _
        // Predicated region
        $region45: #{tpu_custom_call.1} parent=35 // pred_check
          %p221 = pneg %p85
        $region46: #{tpu_custom_call.1} parent=35 // pred_check_branch
          %223 = sbr.rel (%p221) target = $region48
        $region47: #{tpu_custom_call.1} parent=35 // pred_region
          %224 = dma.done [#allocation6], 3072
        $region48: #{tpu_custom_call.1} parent=35 // pred_fallthru
          _
        %s225 = sand.u32 %s30, 1
        %s226 = scalar_lea.sflag [#allocation3], %s225
        %s227 = sand.u32 %s30, 1
        %s228 = smul.addr %s227, 128
        %s229 = scalar_lea.vmem [#allocation2], %s228
        %p230 = pneg %p43
        %p231 = pneg %p40
        %p232 = pneg %p64
        %p233 = pneg %p61
        %p234 = pneg %p85
        %p235 = pneg %p82
        %p236 = pneg %p106
        %p237 = pneg %p103
        %p238 = pneg %p132
        %p239 = pneg %p129
        %s240 = sand.u32 %s119, 1
        %s241 = scalar_lea.sflag [#allocation4], %s240
        %s242 = sand.u32 %s119, 1
        %s243 = smul.addr %s242, 128
        %s244 = scalar_lea.vmem [#allocation8], %s243
        %s245 = smul.u32 16, %s22
        %s246 = smul.u32 16, %s22
        %v248 = vld [vmem:[%s212] sm:$0xff]
        %v249 = vld [vmem:[%s212 + $0x8] sm:$0xff]
        %v250 = vld [vmem:[%s212 + $0x10] sm:$0xff]
        %v251 = vld [vmem:[%s212 + $0x18] sm:$0xff]
        %v252 = vld [vmem:[%s212 + $0x20] sm:$0xff]
        %v253 = vld [vmem:[%s212 + $0x28] sm:$0xff]
        %v254 = vld [vmem:[%s212 + $0x30] sm:$0xff]
        %v255 = vld [vmem:[%s212 + $0x38] sm:$0xff]
        %v256 = vld [vmem:[%s212 + $0x40] sm:$0xff]
        %v257 = vld [vmem:[%s212 + $0x48] sm:$0xff]
        %v258 = vld [vmem:[%s212 + $0x50] sm:$0xff]
        %v259 = vld [vmem:[%s212 + $0x58] sm:$0xff]
        %v260 = vld [vmem:[%s212 + $0x60] sm:$0xff]
        %v261 = vld [vmem:[%s212 + $0x68] sm:$0xff]
        %v262 = vld [vmem:[%s212 + $0x70] sm:$0xff]
        %v263 = vld [vmem:[%s212 + $0x78] sm:$0xff]
        %v264 = vld [vmem:[%s3] sm:$0xf]
        %v265 = vpack.c.bf16 %v249, %v248
        %v266 = vpack.c.bf16 %v251, %v250
        %v267 = vpack.c.bf16 %v253, %v252
        %v268 = vpack.c.bf16 %v255, %v254
        %v269 = vpack.c.bf16 %v257, %v256
        %v270 = vpack.c.bf16 %v259, %v258
        %v271 = vpack.c.bf16 %v261, %v260
        %v272 = vpack.c.bf16 %v263, %v262
        %v273 = vld [vmem:[#allocation5] sm:$0xf]
        %v274 = vld [vmem:[#allocation5 + $0x4] sm:$0xf]
        %v275 = vld [vmem:[#allocation5 + $0x8] sm:$0xf]
        %v276 = vld [vmem:[#allocation5 + $0xc] sm:$0xf]
        %v277 = vld [vmem:[#allocation5 + $0x10] sm:$0xf]
        %v278 = vld [vmem:[#allocation5 + $0x14] sm:$0xf]
        %v279 = vld [vmem:[#allocation5 + $0x18] sm:$0xf]
        %v280 = vld [vmem:[#allocation5 + $0x1c] sm:$0xf]
        %v281 = vld [vmem:[#allocation5 + $0x20] sm:$0xf]
        %v282 = vld [vmem:[#allocation5 + $0x24] sm:$0xf]
        %v283 = vld [vmem:[#allocation5 + $0x28] sm:$0xf]
        %v284 = vld [vmem:[#allocation5 + $0x2c] sm:$0xf]
        %v285 = vld [vmem:[#allocation5 + $0x30] sm:$0xf]
        %v286 = vld [vmem:[#allocation5 + $0x34] sm:$0xf]
        %v287 = vld [vmem:[#allocation5 + $0x38] sm:$0xf]
        %v288 = vld [vmem:[#allocation5 + $0x3c] sm:$0xf]
        %v305 = vunpack.c.l.b16 %v273
        %v306 = vunpack.c.l.b16 %v274
        %v307 = vunpack.c.l.b16 %v275
        %v308 = vunpack.c.l.b16 %v276
        %v309 = vunpack.c.l.b16 %v277
        %v310 = vunpack.c.l.b16 %v278
        %v311 = vunpack.c.l.b16 %v279
        %v312 = vunpack.c.l.b16 %v280
        %v313 = vunpack.c.l.b16 %v281
        %v314 = vunpack.c.l.b16 %v282
        %v315 = vunpack.c.l.b16 %v283
        %v316 = vunpack.c.l.b16 %v284
        %v317 = vunpack.c.l.b16 %v285
        %v318 = vunpack.c.l.b16 %v286
        %v319 = vunpack.c.l.b16 %v287
        %v320 = vunpack.c.l.b16 %v288
        %v321 = vpack.c.b16 %v306, %v305
        %v322 = vpack.c.b16 %v308, %v307
        %v323 = vpack.c.b16 %v310, %v309
        %v324 = vpack.c.b16 %v312, %v311
        %v325 = vpack.c.b16 %v314, %v313
        %v326 = vpack.c.b16 %v316, %v315
        %v327 = vpack.c.b16 %v318, %v317
        %v328 = vpack.c.b16 %v320, %v319
        %337 = vmatprep.subr.bf16.mxu0 0
        %338 = vmatpush1.bf16.msra.mxu0 %v328
        %339 = vmatprep.subr.bf16.mxu0 0
        %340 = vmatpush1.bf16.msra.mxu0 %v327
        %341 = vmatprep.subr.bf16.mxu0 0
        %342 = vmatpush1.bf16.msra.mxu0 %v326
        %343 = vmatprep.subr.bf16.mxu0 0
        %344 = vmatpush1.bf16.msra.mxu0 %v325
        %345 = vmatprep.subr.bf16.mxu0 0
        %346 = vmatpush1.bf16.msra.mxu0 %v324
        %347 = vmatprep.subr.bf16.mxu0 0
        %348 = vmatpush1.bf16.msra.mxu0 %v323
        %349 = vmatprep.subr.bf16.mxu0 0
        %350 = vmatpush1.bf16.msra.mxu0 %v322
        %351 = vmatprep.subr.bf16.mxu0 0
        %352 = vmatpush1.bf16.msra.mxu0 %v321
        %353 = vmatprep.subr.bf16.mxu0 0
        %354 = vmatpush2.bf16.msra.mxu0 0
        %355 = vmatprep.subr.bf16.mxu0 0
        %356 = vmatpush2.bf16.msra.mxu0 0
        %357 = vmatprep.subr.bf16.mxu0 0
        %358 = vmatpush2.bf16.msra.mxu0 0
        %359 = vmatprep.subr.bf16.mxu0 0
        %360 = vmatpush2.bf16.msra.mxu0 0
        %361 = vmatprep.subr.bf16.mxu0 0
        %362 = vmatpush2.bf16.msra.mxu0 0
        %363 = vmatprep.subr.bf16.mxu0 0
        %364 = vmatpush2.bf16.msra.mxu0 0
        %365 = vmatprep.subr.bf16.mxu0 0
        %366 = vmatpush2.bf16.msra.mxu0 0
        %367 = vmatprep.subr.bf16.mxu0 0
        %368 = vmatpush2.bf16.msra.mxu0 0
        %369 = vmatprep.mubr.bf16.mxu0 0
        %370 = vmatmul.mubr.bf16.gmra.mxu0 %v265
        %v371 = vpop.f32.mrf.mxu0
        %v372 = vadd.f32 0.0, %v371
        %v373 = vpop.f32.mrf.mxu0
        %v374 = vpop.f32.mrf.mxu0
        %v375 = vadd.f32 0.0, %v374
        %v376 = vpop.f32.mrf.mxu0
        %377 = vmatprep.mubr.bf16.mxu0 0
        %378 = vmatmul.mubr.bf16.gmra.mxu0 %v266
        %v379 = vpop.f32.mrf.mxu0
        %v380 = vadd.f32 0.0, %v379
        %v381 = vpop.f32.mrf.mxu0
        %v382 = vpop.f32.mrf.mxu0
        %v383 = vadd.f32 0.0, %v382
        %v384 = vpop.f32.mrf.mxu0
        %385 = vmatprep.mubr.bf16.mxu0 0
        %386 = vmatmul.mubr.bf16.gmra.mxu0 %v267
        %v387 = vpop.f32.mrf.mxu0
        %v388 = vadd.f32 0.0, %v387
        %v389 = vpop.f32.mrf.mxu0
        %v390 = vpop.f32.mrf.mxu0
        %v391 = vadd.f32 0.0, %v390
        %v392 = vpop.f32.mrf.mxu0
        %393 = vmatprep.mubr.bf16.mxu0 0
        %394 = vmatmul.mubr.bf16.gmra.mxu0 %v268
        %v395 = vpop.f32.mrf.mxu0
        %v396 = vadd.f32 0.0, %v395
        %v397 = vpop.f32.mrf.mxu0
        %v398 = vpop.f32.mrf.mxu0
        %v399 = vadd.f32 0.0, %v398
        %v400 = vpop.f32.mrf.mxu0
        %401 = vmatprep.mubr.bf16.mxu0 0
        %402 = vmatmul.mubr.bf16.gmra.mxu0 %v269
        %v403 = vpop.f32.mrf.mxu0
        %v404 = vadd.f32 0.0, %v403
        %v405 = vpop.f32.mrf.mxu0
        %v406 = vpop.f32.mrf.mxu0
        %v407 = vadd.f32 0.0, %v406
        %v408 = vpop.f32.mrf.mxu0
        %409 = vmatprep.mubr.bf16.mxu0 0
        %410 = vmatmul.mubr.bf16.gmra.mxu0 %v270
        %v411 = vpop.f32.mrf.mxu0
        %v412 = vadd.f32 0.0, %v411
        %v413 = vpop.f32.mrf.mxu0
        %v414 = vpop.f32.mrf.mxu0
        %v415 = vadd.f32 0.0, %v414
        %v416 = vpop.f32.mrf.mxu0
        %417 = vmatprep.mubr.bf16.mxu0 0
        %418 = vmatmul.mubr.bf16.gmra.mxu0 %v271
        %v419 = vpop.f32.mrf.mxu0
        %v420 = vadd.f32 0.0, %v419
        %v421 = vpop.f32.mrf.mxu0
        %v422 = vpop.f32.mrf.mxu0
        %v423 = vadd.f32 0.0, %v422
        %v424 = vpop.f32.mrf.mxu0
        %425 = vmatprep.mubr.bf16.mxu0 0
        %426 = vmatmul.mubr.bf16.gmra.mxu0 %v272
        %v427 = vpop.f32.mrf.mxu0
        %v428 = vadd.f32 0.0, %v427
        %v429 = vpop.f32.mrf.mxu0
        %v430 = vpop.f32.mrf.mxu0
        %v431 = vadd.f32 0.0, %v430
        %v432 = vpop.f32.mrf.mxu0
        %433 = vdwg.mxu0
        %v434 = vlaneseq
        %v435 = vshrl.u32 %v434, 7
        %v436 = vsub.s32 0, %v435
        %v437 = vrot.slane %v264, %v436
        %v438 = vmul.f32 %v372, %v437
        %v439 = vmul.f32 %v375, %v437
        %v440 = vmul.f32 %v380, %v437
        %v441 = vmul.f32 %v383, %v437
        %v442 = vmul.f32 %v388, %v437
        %v443 = vmul.f32 %v391, %v437
        %v444 = vmul.f32 %v396, %v437
        %v445 = vmul.f32 %v399, %v437
        %v446 = vmul.f32 %v404, %v437
        %v447 = vmul.f32 %v407, %v437
        %v448 = vmul.f32 %v412, %v437
        %v449 = vmul.f32 %v415, %v437
        %v450 = vmul.f32 %v420, %v437
        %v451 = vmul.f32 %v423, %v437
        %v452 = vmul.f32 %v428, %v437
        %v453 = vmul.f32 %v431, %v437
        %v454 = vlaneseq
        %v455 = vshrl.u32 %v454, 7
        %v456 = vsub.s32 1, %v455
        %v457 = vrot.slane %v264, %v456
        %v458 = vadd.f32 %v438, %v457
        %v459 = vadd.f32 %v439, %v457
        %v460 = vadd.f32 %v440, %v457
        %v461 = vadd.f32 %v441, %v457
        %v462 = vadd.f32 %v442, %v457
        %v463 = vadd.f32 %v443, %v457
        %v464 = vadd.f32 %v444, %v457
        %v465 = vadd.f32 %v445, %v457
        %v466 = vadd.f32 %v446, %v457
        %v467 = vadd.f32 %v447, %v457
        %v468 = vadd.f32 %v448, %v457
        %v469 = vadd.f32 %v449, %v457
        %v470 = vadd.f32 %v450, %v457
        %v471 = vadd.f32 %v451, %v457
        %v472 = vadd.f32 %v452, %v457
        %v473 = vadd.f32 %v453, %v457
        %v474 = vmul.f32 %v458, 0.005
        %v475 = vmul.f32 %v459, 0.005
        %v476 = vmul.f32 %v460, 0.005
        %v477 = vmul.f32 %v461, 0.005
        %v478 = vmul.f32 %v462, 0.005
        %v479 = vmul.f32 %v463, 0.005
        %v480 = vmul.f32 %v464, 0.005
        %v481 = vmul.f32 %v465, 0.005
        %v482 = vmul.f32 %v466, 0.005
        %v483 = vmul.f32 %v467, 0.005
        %v484 = vmul.f32 %v468, 0.005
        %v485 = vmul.f32 %v469, 0.005
        %v486 = vmul.f32 %v470, 0.005
        %v487 = vmul.f32 %v471, 0.005
        %v488 = vmul.f32 %v472, 0.005
        %v489 = vmul.f32 %v473, 0.005
        %v490 = vadd.f32 %v474, 1.0
        %v491 = vadd.f32 %v475, 1.0
        %v492 = vadd.f32 %v476, 1.0
        %v493 = vadd.f32 %v477, 1.0
        %v494 = vadd.f32 %v478, 1.0
        %v495 = vadd.f32 %v479, 1.0
        %v496 = vadd.f32 %v480, 1.0
        %v497 = vadd.f32 %v481, 1.0
        %v498 = vadd.f32 %v482, 1.0
        %v499 = vadd.f32 %v483, 1.0
        %v500 = vadd.f32 %v484, 1.0
        %v501 = vadd.f32 %v485, 1.0
        %v502 = vadd.f32 %v486, 1.0
        %v503 = vadd.f32 %v487, 1.0
        %v504 = vadd.f32 %v488, 1.0
        %v505 = vadd.f32 %v489, 1.0
        %v506 = vmul.f32 %v458, %v490
        %v507 = vmul.f32 %v459, %v491
        %v508 = vmul.f32 %v460, %v492
        %v509 = vmul.f32 %v461, %v493
        %v510 = vmul.f32 %v462, %v494
        %v511 = vmul.f32 %v463, %v495
        %v512 = vmul.f32 %v464, %v496
        %v513 = vmul.f32 %v465, %v497
        %v514 = vmul.f32 %v466, %v498
        %v515 = vmul.f32 %v467, %v499
        %v516 = vmul.f32 %v468, %v500
        %v517 = vmul.f32 %v469, %v501
        %v518 = vmul.f32 %v470, %v502
        %v519 = vmul.f32 %v471, %v503
        %v520 = vmul.f32 %v472, %v504
        %v521 = vmul.f32 %v473, %v505
        %v522 = vpack.c.bf16 %v507, %v506
        %v523 = vpack.c.bf16 %v509, %v508
        %v524 = vpack.c.bf16 %v511, %v510
        %v525 = vpack.c.bf16 %v513, %v512
        %v526 = vpack.c.bf16 %v515, %v514
        %v527 = vpack.c.bf16 %v517, %v516
        %v528 = vpack.c.bf16 %v519, %v518
        %v529 = vpack.c.bf16 %v521, %v520
        %v530 = vlaneseq
        %v531 = vshrl.u32 %v530, 7
        %v532 = vadd.s32 %v531, 8
        %v533 = vadd.s32 %v531, 16
        %v534 = vadd.s32 %v531, 24
        %v535 = vadd.s32 %v531, 32
        %v536 = vadd.s32 %v531, 40
        %v537 = vadd.s32 %v531, 48
        %v538 = vadd.s32 %v531, 56
        %v539 = vadd.s32 %v531, 64
        %v540 = vadd.s32 %v531, 72
        %v541 = vadd.s32 %v531, 80
        %v542 = vadd.s32 %v531, 88
        %v543 = vadd.s32 %v531, 96
        %v544 = vadd.s32 %v531, 104
        %v545 = vadd.s32 %v531, 112
        %v546 = vadd.s32 %v531, 120
        %vm547 = vcmp.lt.s32.totalorder %v531, 0
        %v548 = vsub.s32 0, %v531
        %v549 = vsel %vm547, %v548, %v531
        %v550 = vshrl.u32 %v549, 3
        %v551 = vand.u32 %v549, 7
        %v552 = vsub.s32 0, %v551
        %v553 = vsel %vm547, %v552, %v551
        %vm554 = vcmp.lt.s32.totalorder %v532, 0
        %v555 = vsub.s32 0, %v532
        %v556 = vsel %vm554, %v555, %v532
        %v557 = vshrl.u32 %v556, 3
        %v558 = vand.u32 %v556, 7
        %v559 = vsub.s32 0, %v558
        %v560 = vsel %vm554, %v559, %v558
        %vm561 = vcmp.lt.s32.totalorder %v533, 0
        %v562 = vsub.s32 0, %v533
        %v563 = vsel %vm561, %v562, %v533
        %v564 = vshrl.u32 %v563, 3
        %v565 = vand.u32 %v563, 7
        %v566 = vsub.s32 0, %v565
        %v567 = vsel %vm561, %v566, %v565
        %vm568 = vcmp.lt.s32.totalorder %v534, 0
        %v569 = vsub.s32 0, %v534
        %v570 = vsel %vm568, %v569, %v534
        %v571 = vshrl.u32 %v570, 3
        %v572 = vand.u32 %v570, 7
        %v573 = vsub.s32 0, %v572
        %v574 = vsel %vm568, %v573, %v572
        %vm575 = vcmp.lt.s32.totalorder %v535, 0
        %v576 = vsub.s32 0, %v535
        %v577 = vsel %vm575, %v576, %v535
        %v578 = vshrl.u32 %v577, 3
        %v579 = vand.u32 %v577, 7
        %v580 = vsub.s32 0, %v579
        %v581 = vsel %vm575, %v580, %v579
        %vm582 = vcmp.lt.s32.totalorder %v536, 0
        %v583 = vsub.s32 0, %v536
        %v584 = vsel %vm582, %v583, %v536
        %v585 = vshrl.u32 %v584, 3
        %v586 = vand.u32 %v584, 7
        %v587 = vsub.s32 0, %v586
        %v588 = vsel %vm582, %v587, %v586
        %vm589 = vcmp.lt.s32.totalorder %v537, 0
        %v590 = vsub.s32 0, %v537
        %v591 = vsel %vm589, %v590, %v537
        %v592 = vshrl.u32 %v591, 3
        %v593 = vand.u32 %v591, 7
        %v594 = vsub.s32 0, %v593
        %v595 = vsel %vm589, %v594, %v593
        %vm596 = vcmp.lt.s32.totalorder %v538, 0
        %v597 = vsub.s32 0, %v538
        %v598 = vsel %vm596, %v597, %v538
        %v599 = vshrl.u32 %v598, 3
        %v600 = vand.u32 %v598, 7
        %v601 = vsub.s32 0, %v600
        %v602 = vsel %vm596, %v601, %v600
        %vm603 = vcmp.lt.s32.totalorder %v539, 0
        %v604 = vsub.s32 0, %v539
        %v605 = vsel %vm603, %v604, %v539
        %v606 = vshrl.u32 %v605, 3
        %v607 = vand.u32 %v605, 7
        %v608 = vsub.s32 0, %v607
        %v609 = vsel %vm603, %v608, %v607
        %vm610 = vcmp.lt.s32.totalorder %v540, 0
        %v611 = vsub.s32 0, %v540
        %v612 = vsel %vm610, %v611, %v540
        %v613 = vshrl.u32 %v612, 3
        %v614 = vand.u32 %v612, 7
        %v615 = vsub.s32 0, %v614
        %v616 = vsel %vm610, %v615, %v614
        %vm617 = vcmp.lt.s32.totalorder %v541, 0
        %v618 = vsub.s32 0, %v541
        %v619 = vsel %vm617, %v618, %v541
        %v620 = vshrl.u32 %v619, 3
        %v621 = vand.u32 %v619, 7
        %v622 = vsub.s32 0, %v621
        %v623 = vsel %vm617, %v622, %v621
        %vm624 = vcmp.lt.s32.totalorder %v542, 0
        %v625 = vsub.s32 0, %v542
        %v626 = vsel %vm624, %v625, %v542
        %v627 = vshrl.u32 %v626, 3
        %v628 = vand.u32 %v626, 7
        %v629 = vsub.s32 0, %v628
        %v630 = vsel %vm624, %v629, %v628
        %vm631 = vcmp.lt.s32.totalorder %v543, 0
        %v632 = vsub.s32 0, %v543
        %v633 = vsel %vm631, %v632, %v543
        %v634 = vshrl.u32 %v633, 3
        %v635 = vand.u32 %v633, 7
        %v636 = vsub.s32 0, %v635
        %v637 = vsel %vm631, %v636, %v635
        %vm638 = vcmp.lt.s32.totalorder %v544, 0
        %v639 = vsub.s32 0, %v544
        %v640 = vsel %vm638, %v639, %v544
        %v641 = vshrl.u32 %v640, 3
        %v642 = vand.u32 %v640, 7
        %v643 = vsub.s32 0, %v642
        %v644 = vsel %vm638, %v643, %v642
        %vm645 = vcmp.lt.s32.totalorder %v545, 0
        %v646 = vsub.s32 0, %v545
        %v647 = vsel %vm645, %v646, %v545
        %v648 = vshrl.u32 %v647, 3
        %v649 = vand.u32 %v647, 7
        %v650 = vsub.s32 0, %v649
        %v651 = vsel %vm645, %v650, %v649
        %vm652 = vcmp.lt.s32.totalorder %v546, 0
        %v653 = vsub.s32 0, %v546
        %v654 = vsel %vm652, %v653, %v546
        %v655 = vshrl.u32 %v654, 3
        %v656 = vand.u32 %v654, 7
        %v657 = vsub.s32 0, %v656
        %v658 = vsel %vm652, %v657, %v656
        %vm659 = vcmp.ne.s32.totalorder %v553, 0
        %vm660 = vcmp.ne.s32.totalorder %v560, 0
        %vm661 = vcmp.ne.s32.totalorder %v567, 0
        %vm662 = vcmp.ne.s32.totalorder %v574, 0
        %vm663 = vcmp.ne.s32.totalorder %v581, 0
        %vm664 = vcmp.ne.s32.totalorder %v588, 0
        %vm665 = vcmp.ne.s32.totalorder %v595, 0
        %vm666 = vcmp.ne.s32.totalorder %v602, 0
        %vm667 = vcmp.ne.s32.totalorder %v609, 0
        %vm668 = vcmp.ne.s32.totalorder %v616, 0
        %vm669 = vcmp.ne.s32.totalorder %v623, 0
        %vm670 = vcmp.ne.s32.totalorder %v630, 0
        %vm671 = vcmp.ne.s32.totalorder %v637, 0
        %vm672 = vcmp.ne.s32.totalorder %v644, 0
        %vm673 = vcmp.ne.s32.totalorder %v651, 0
        %vm674 = vcmp.ne.s32.totalorder %v658, 0
        %vm675 = vcmp.lt.s32.totalorder %v553, 0
        %vm676 = vcmp.lt.s32.totalorder %v560, 0
        %vm677 = vcmp.lt.s32.totalorder %v567, 0
        %vm678 = vcmp.lt.s32.totalorder %v574, 0
        %vm679 = vcmp.lt.s32.totalorder %v581, 0
        %vm680 = vcmp.lt.s32.totalorder %v588, 0
        %vm681 = vcmp.lt.s32.totalorder %v595, 0
        %vm682 = vcmp.lt.s32.totalorder %v602, 0
        %vm683 = vcmp.lt.s32.totalorder %v609, 0
        %vm684 = vcmp.lt.s32.totalorder %v616, 0
        %vm685 = vcmp.lt.s32.totalorder %v623, 0
        %vm686 = vcmp.lt.s32.totalorder %v630, 0
        %vm687 = vcmp.lt.s32.totalorder %v637, 0
        %vm688 = vcmp.lt.s32.totalorder %v644, 0
        %vm689 = vcmp.lt.s32.totalorder %v651, 0
        %vm690 = vcmp.lt.s32.totalorder %v658, 0
        %vm691 = vmand %vm675, %vm659
        %vm692 = vmand %vm676, %vm660
        %vm693 = vmand %vm677, %vm661
        %vm694 = vmand %vm678, %vm662
        %vm695 = vmand %vm679, %vm663
        %vm696 = vmand %vm680, %vm664
        %vm697 = vmand %vm681, %vm665
        %vm698 = vmand %vm682, %vm666
        %vm699 = vmand %vm683, %vm667
        %vm700 = vmand %vm684, %vm668
        %vm701 = vmand %vm685, %vm669
        %vm702 = vmand %vm686, %vm670
        %vm703 = vmand %vm687, %vm671
        %vm704 = vmand %vm688, %vm672
        %vm705 = vmand %vm689, %vm673
        %vm706 = vmand %vm690, %vm674
        %v707 = vadd.s32 %v553, 8
        %v708 = vadd.s32 %v560, 8
        %v709 = vadd.s32 %v567, 8
        %v710 = vadd.s32 %v574, 8
        %v711 = vadd.s32 %v581, 8
        %v712 = vadd.s32 %v588, 8
        %v713 = vadd.s32 %v595, 8
        %v714 = vadd.s32 %v602, 8
        %v715 = vadd.s32 %v609, 8
        %v716 = vadd.s32 %v616, 8
        %v717 = vadd.s32 %v623, 8
        %v718 = vadd.s32 %v630, 8
        %v719 = vadd.s32 %v637, 8
        %v720 = vadd.s32 %v644, 8
        %v721 = vadd.s32 %v651, 8
        %v722 = vadd.s32 %v658, 8
        %v723 = vsel %vm691, %v707, %v553
        %v724 = vsel %vm692, %v708, %v560
        %v725 = vsel %vm693, %v709, %v567
        %v726 = vsel %vm694, %v710, %v574
        %v727 = vsel %vm695, %v711, %v581
        %v728 = vsel %vm696, %v712, %v588
        %v729 = vsel %vm697, %v713, %v595
        %v730 = vsel %vm698, %v714, %v602
        %v731 = vsel %vm699, %v715, %v609
        %v732 = vsel %vm700, %v716, %v616
        %v733 = vsel %vm701, %v717, %v623
        %v734 = vsel %vm702, %v718, %v630
        %v735 = vsel %vm703, %v719, %v637
        %v736 = vsel %vm704, %v720, %v644
        %v737 = vsel %vm705, %v721, %v651
        %v738 = vsel %vm706, %v722, %v658
        %v739 = vld [vmem:[#allocation7] sm:$0xf]
        %v740 = vld [vmem:[#allocation7 + $0x4] sm:$0xf]
        %v741 = vld [vmem:[#allocation7 + $0x8] sm:$0xf]
        %v742 = vld [vmem:[#allocation7 + $0xc] sm:$0xf]
        %v743 = vld [vmem:[#allocation7 + $0x10] sm:$0xf]
        %v744 = vld [vmem:[#allocation7 + $0x14] sm:$0xf]
        %v745 = vld [vmem:[#allocation7 + $0x18] sm:$0xf]
        %v746 = vld [vmem:[#allocation7 + $0x1c] sm:$0xf]
        %v747 = vld [vmem:[#allocation7 + $0x20] sm:$0xf]
        %v748 = vld [vmem:[#allocation7 + $0x24] sm:$0xf]
        %v749 = vld [vmem:[#allocation7 + $0x28] sm:$0xf]
        %v750 = vld [vmem:[#allocation7 + $0x2c] sm:$0xf]
        %v751 = vld [vmem:[#allocation7 + $0x30] sm:$0xf]
        %v752 = vld [vmem:[#allocation7 + $0x34] sm:$0xf]
        %v753 = vld [vmem:[#allocation7 + $0x38] sm:$0xf]
        %v754 = vld [vmem:[#allocation7 + $0x3c] sm:$0xf]
        %v771 = vunpack.c.l.b16 %v739
        %v772 = vunpack.c.l.b16 %v740
        %v773 = vunpack.c.l.b16 %v741
        %v774 = vunpack.c.l.b16 %v742
        %v775 = vunpack.c.l.b16 %v743
        %v776 = vunpack.c.l.b16 %v744
        %v777 = vunpack.c.l.b16 %v745
        %v778 = vunpack.c.l.b16 %v746
        %v779 = vunpack.c.l.b16 %v747
        %v780 = vunpack.c.l.b16 %v748
        %v781 = vunpack.c.l.b16 %v749
        %v782 = vunpack.c.l.b16 %v750
        %v783 = vunpack.c.l.b16 %v751
        %v784 = vunpack.c.l.b16 %v752
        %v785 = vunpack.c.l.b16 %v753
        %v786 = vunpack.c.l.b16 %v754
        %v787 = vpack.c.b16 %v772, %v771
        %v788 = vpack.c.b16 %v774, %v773
        %v789 = vpack.c.b16 %v776, %v775
        %v790 = vpack.c.b16 %v778, %v777
        %v791 = vpack.c.b16 %v780, %v779
        %v792 = vpack.c.b16 %v782, %v781
        %v793 = vpack.c.b16 %v784, %v783
        %v794 = vpack.c.b16 %v786, %v785
        %803 = vmatprep.subr.bf16.mxu0 0
        %804 = vmatpush1.bf16.msra.mxu0 %v794
        %805 = vmatprep.subr.bf16.mxu0 0
        %806 = vmatpush1.bf16.msra.mxu0 %v793
        %807 = vmatprep.subr.bf16.mxu0 0
        %808 = vmatpush1.bf16.msra.mxu0 %v792
        %809 = vmatprep.subr.bf16.mxu0 0
        %810 = vmatpush1.bf16.msra.mxu0 %v791
        %811 = vmatprep.subr.bf16.mxu0 0
        %812 = vmatpush1.bf16.msra.mxu0 %v790
        %813 = vmatprep.subr.bf16.mxu0 0
        %814 = vmatpush1.bf16.msra.mxu0 %v789
        %815 = vmatprep.subr.bf16.mxu0 0
        %816 = vmatpush1.bf16.msra.mxu0 %v788
        %817 = vmatprep.subr.bf16.mxu0 0
        %818 = vmatpush1.bf16.msra.mxu0 %v787
        %819 = vmatprep.subr.bf16.mxu0 0
        %820 = vmatpush2.bf16.msra.mxu0 0
        %821 = vmatprep.subr.bf16.mxu0 0
        %822 = vmatpush2.bf16.msra.mxu0 0
        %823 = vmatprep.subr.bf16.mxu0 0
        %824 = vmatpush2.bf16.msra.mxu0 0
        %825 = vmatprep.subr.bf16.mxu0 0
        %826 = vmatpush2.bf16.msra.mxu0 0
        %827 = vmatprep.subr.bf16.mxu0 0
        %828 = vmatpush2.bf16.msra.mxu0 0
        %829 = vmatprep.subr.bf16.mxu0 0
        %830 = vmatpush2.bf16.msra.mxu0 0
        %831 = vmatprep.subr.bf16.mxu0 0
        %832 = vmatpush2.bf16.msra.mxu0 0
        %833 = vmatprep.subr.bf16.mxu0 0
        %834 = vmatpush2.bf16.msra.mxu0 0
        %835 = vmatprep.mubr.bf16.mxu0 0
        %836 = vmatmul.mubr.bf16.gmra.mxu0 %v522
        %v837 = vpop.f32.mrf.mxu0
        %v838 = vadd.f32 0.0, %v837
        %v839 = vpop.f32.mrf.mxu0
        %v840 = vpop.f32.mrf.mxu0
        %v841 = vadd.f32 0.0, %v840
        %v842 = vpop.f32.mrf.mxu0
        %843 = vmatprep.mubr.bf16.mxu0 0
        %844 = vmatmul.mubr.bf16.gmra.mxu0 %v523
        %v845 = vpop.f32.mrf.mxu0
        %v846 = vadd.f32 0.0, %v845
        %v847 = vpop.f32.mrf.mxu0
        %v848 = vpop.f32.mrf.mxu0
        %v849 = vadd.f32 0.0, %v848
        %v850 = vpop.f32.mrf.mxu0
        %851 = vmatprep.mubr.bf16.mxu0 0
        %852 = vmatmul.mubr.bf16.gmra.mxu0 %v524
        %v853 = vpop.f32.mrf.mxu0
        %v854 = vadd.f32 0.0, %v853
        %v855 = vpop.f32.mrf.mxu0
        %v856 = vpop.f32.mrf.mxu0
        %v857 = vadd.f32 0.0, %v856
        %v858 = vpop.f32.mrf.mxu0
        %859 = vmatprep.mubr.bf16.mxu0 0
        %860 = vmatmul.mubr.bf16.gmra.mxu0 %v525
        %v861 = vpop.f32.mrf.mxu0
        %v862 = vadd.f32 0.0, %v861
        %v863 = vpop.f32.mrf.mxu0
        %v864 = vpop.f32.mrf.mxu0
        %v865 = vadd.f32 0.0, %v864
        %v866 = vpop.f32.mrf.mxu0
        %867 = vmatprep.mubr.bf16.mxu0 0
        %868 = vmatmul.mubr.bf16.gmra.mxu0 %v526
        %v869 = vpop.f32.mrf.mxu0
        %v870 = vadd.f32 0.0, %v869
        %v871 = vpop.f32.mrf.mxu0
        %v872 = vpop.f32.mrf.mxu0
        %v873 = vadd.f32 0.0, %v872
        %v874 = vpop.f32.mrf.mxu0
        %875 = vmatprep.mubr.bf16.mxu0 0
        %876 = vmatmul.mubr.bf16.gmra.mxu0 %v527
        %v877 = vpop.f32.mrf.mxu0
        %v878 = vadd.f32 0.0, %v877
        %v879 = vpop.f32.mrf.mxu0
        %v880 = vpop.f32.mrf.mxu0
        %v881 = vadd.f32 0.0, %v880
        %v882 = vpop.f32.mrf.mxu0
        %883 = vmatprep.mubr.bf16.mxu0 0
        %884 = vmatmul.mubr.bf16.gmra.mxu0 %v528
        %v885 = vpop.f32.mrf.mxu0
        %v886 = vadd.f32 0.0, %v885
        %v887 = vpop.f32.mrf.mxu0
        %v888 = vpop.f32.mrf.mxu0
        %v889 = vadd.f32 0.0, %v888
        %v890 = vpop.f32.mrf.mxu0
        %891 = vmatprep.mubr.bf16.mxu0 0
        %892 = vmatmul.mubr.bf16.gmra.mxu0 %v529
        %v893 = vpop.f32.mrf.mxu0
        %v894 = vadd.f32 0.0, %v893
        %v895 = vpop.f32.mrf.mxu0
        %v896 = vpop.f32.mrf.mxu0
        %v897 = vadd.f32 0.0, %v896
        %v898 = vpop.f32.mrf.mxu0
        %899 = vdwg.mxu0
        %v900 = vrot.slane %v838, 7
        %v901 = vrot.slane %v841, 7
        %v902 = vrot.slane %v846, 7
        %v903 = vrot.slane %v849, 7
        %v904 = vrot.slane %v854, 7
        %v905 = vrot.slane %v857, 7
        %v906 = vrot.slane %v862, 7
        %v907 = vrot.slane %v865, 7
        %v908 = vrot.slane %v870, 7
        %v909 = vrot.slane %v873, 7
        %v910 = vrot.slane %v878, 7
        %v911 = vrot.slane %v881, 7
        %v912 = vrot.slane %v886, 7
        %v913 = vrot.slane %v889, 7
        %v914 = vrot.slane %v894, 7
        %v915 = vrot.slane %v897, 7
        %vm916 = vcmp.lt.s32.totalorder %v531, 1
        %v917 = vsel %vm916, %v914, %v915
        %v918 = vsel %vm916, %v913, %v914
        %v919 = vsel %vm916, %v912, %v913
        %v920 = vsel %vm916, %v911, %v912
        %v921 = vsel %vm916, %v910, %v911
        %v922 = vsel %vm916, %v909, %v910
        %v923 = vsel %vm916, %v908, %v909
        %v924 = vsel %vm916, %v907, %v908
        %v925 = vsel %vm916, %v906, %v907
        %v926 = vsel %vm916, %v905, %v906
        %v927 = vsel %vm916, %v904, %v905
        %v928 = vsel %vm916, %v903, %v904
        %v929 = vsel %vm916, %v902, %v903
        %v930 = vsel %vm916, %v901, %v902
        %v931 = vsel %vm916, %v900, %v901
        %v932 = vsel %vm916, %v915, %v900
        %vm933 = vcmp.ge.s32.totalorder %v723, 1
        %vm934 = vcmp.ge.s32.totalorder %v724, 1
        %vm935 = vcmp.ge.s32.totalorder %v725, 1
        %vm936 = vcmp.ge.s32.totalorder %v726, 1
        %vm937 = vcmp.ge.s32.totalorder %v727, 1
        %vm938 = vcmp.ge.s32.totalorder %v728, 1
        %vm939 = vcmp.ge.s32.totalorder %v729, 1
        %vm940 = vcmp.ge.s32.totalorder %v730, 1
        %vm941 = vcmp.ge.s32.totalorder %v731, 1
        %vm942 = vcmp.ge.s32.totalorder %v732, 1
        %vm943 = vcmp.ge.s32.totalorder %v733, 1
        %vm944 = vcmp.ge.s32.totalorder %v734, 1
        %vm945 = vcmp.ge.s32.totalorder %v735, 1
        %vm946 = vcmp.ge.s32.totalorder %v736, 1
        %vm947 = vcmp.ge.s32.totalorder %v737, 1
        %vm948 = vcmp.ge.s32.totalorder %v738, 1
        %v949 = vsel %vm933, 1, 0
        %v950 = vsel %vm934, 1, 0
        %v951 = vsel %vm935, 1, 0
        %v952 = vsel %vm936, 1, 0
        %v953 = vsel %vm937, 1, 0
        %v954 = vsel %vm938, 1, 0
        %v955 = vsel %vm939, 1, 0
        %v956 = vsel %vm940, 1, 0
        %v957 = vsel %vm941, 1, 0
        %v958 = vsel %vm942, 1, 0
        %v959 = vsel %vm943, 1, 0
        %v960 = vsel %vm944, 1, 0
        %v961 = vsel %vm945, 1, 0
        %v962 = vsel %vm946, 1, 0
        %v963 = vsel %vm947, 1, 0
        %v964 = vsel %vm948, 1, 0
        %vm965 = vcmp.eq.s32.totalorder %v949, 1
        %vm966 = vcmp.eq.s32.totalorder %v950, 1
        %vm967 = vcmp.eq.s32.totalorder %v951, 1
        %vm968 = vcmp.eq.s32.totalorder %v952, 1
        %vm969 = vcmp.eq.s32.totalorder %v953, 1
        %vm970 = vcmp.eq.s32.totalorder %v954, 1
        %vm971 = vcmp.eq.s32.totalorder %v955, 1
        %vm972 = vcmp.eq.s32.totalorder %v956, 1
        %vm973 = vcmp.eq.s32.totalorder %v957, 1
        %vm974 = vcmp.eq.s32.totalorder %v958, 1
        %vm975 = vcmp.eq.s32.totalorder %v959, 1
        %vm976 = vcmp.eq.s32.totalorder %v960, 1
        %vm977 = vcmp.eq.s32.totalorder %v961, 1
        %vm978 = vcmp.eq.s32.totalorder %v962, 1
        %vm979 = vcmp.eq.s32.totalorder %v963, 1
        %vm980 = vcmp.eq.s32.totalorder %v964, 1
        %v981 = vsel %vm965, %v932, 0.0
        %v982 = vsel %vm966, %v931, 0.0
        %v983 = vsel %vm967, %v930, 0.0
        %v984 = vsel %vm968, %v929, 0.0
        %v985 = vsel %vm969, %v928, 0.0
        %v986 = vsel %vm970, %v927, 0.0
        %v987 = vsel %vm971, %v926, 0.0
        %v988 = vsel %vm972, %v925, 0.0
        %v989 = vsel %vm973, %v924, 0.0
        %v990 = vsel %vm974, %v923, 0.0
        %v991 = vsel %vm975, %v922, 0.0
        %v992 = vsel %vm976, %v921, 0.0
        %v993 = vsel %vm977, %v920, 0.0
        %v994 = vsel %vm978, %v919, 0.0
        %v995 = vsel %vm979, %v918, 0.0
        %v996 = vsel %vm980, %v917, 0.0
        %s997 = scalar_lea.vmem [#allocation7], 64
        %v998 = vld [vmem:[%s997] sm:$0xf]
        %v999 = vld [vmem:[%s997 + $0x4] sm:$0xf]
        %v1000 = vld [vmem:[%s997 + $0x8] sm:$0xf]
        %v1001 = vld [vmem:[%s997 + $0xc] sm:$0xf]
        %v1002 = vld [vmem:[%s997 + $0x10] sm:$0xf]
        %v1003 = vld [vmem:[%s997 + $0x14] sm:$0xf]
        %v1004 = vld [vmem:[%s997 + $0x18] sm:$0xf]
        %v1005 = vld [vmem:[%s997 + $0x1c] sm:$0xf]
        %v1006 = vld [vmem:[%s997 + $0x20] sm:$0xf]
        %v1007 = vld [vmem:[%s997 + $0x24] sm:$0xf]
        %v1008 = vld [vmem:[%s997 + $0x28] sm:$0xf]
        %v1009 = vld [vmem:[%s997 + $0x2c] sm:$0xf]
        %v1010 = vld [vmem:[%s997 + $0x30] sm:$0xf]
        %v1011 = vld [vmem:[%s997 + $0x34] sm:$0xf]
        %v1012 = vld [vmem:[%s997 + $0x38] sm:$0xf]
        %v1013 = vld [vmem:[%s997 + $0x3c] sm:$0xf]
        %v1030 = vunpack.c.l.b16 %v998
        %v1031 = vunpack.c.l.b16 %v999
        %v1032 = vunpack.c.l.b16 %v1000
        %v1033 = vunpack.c.l.b16 %v1001
        %v1034 = vunpack.c.l.b16 %v1002
        %v1035 = vunpack.c.l.b16 %v1003
        %v1036 = vunpack.c.l.b16 %v1004
        %v1037 = vunpack.c.l.b16 %v1005
        %v1038 = vunpack.c.l.b16 %v1006
        %v1039 = vunpack.c.l.b16 %v1007
        %v1040 = vunpack.c.l.b16 %v1008
        %v1041 = vunpack.c.l.b16 %v1009
        %v1042 = vunpack.c.l.b16 %v1010
        %v1043 = vunpack.c.l.b16 %v1011
        %v1044 = vunpack.c.l.b16 %v1012
        %v1045 = vunpack.c.l.b16 %v1013
        %v1046 = vpack.c.b16 %v1031, %v1030
        %v1047 = vpack.c.b16 %v1033, %v1032
        %v1048 = vpack.c.b16 %v1035, %v1034
        %v1049 = vpack.c.b16 %v1037, %v1036
        %v1050 = vpack.c.b16 %v1039, %v1038
        %v1051 = vpack.c.b16 %v1041, %v1040
        %v1052 = vpack.c.b16 %v1043, %v1042
        %v1053 = vpack.c.b16 %v1045, %v1044
        %1062 = vmatprep.subr.bf16.mxu0 0
        %1063 = vmatpush1.bf16.msra.mxu0 %v1053
        %1064 = vmatprep.subr.bf16.mxu0 0
        %1065 = vmatpush1.bf16.msra.mxu0 %v1052
        %1066 = vmatprep.subr.bf16.mxu0 0
        %1067 = vmatpush1.bf16.msra.mxu0 %v1051
        %1068 = vmatprep.subr.bf16.mxu0 0
        %1069 = vmatpush1.bf16.msra.mxu0 %v1050
        %1070 = vmatprep.subr.bf16.mxu0 0
        %1071 = vmatpush1.bf16.msra.mxu0 %v1049
        %1072 = vmatprep.subr.bf16.mxu0 0
        %1073 = vmatpush1.bf16.msra.mxu0 %v1048
        %1074 = vmatprep.subr.bf16.mxu0 0
        %1075 = vmatpush1.bf16.msra.mxu0 %v1047
        %1076 = vmatprep.subr.bf16.mxu0 0
        %1077 = vmatpush1.bf16.msra.mxu0 %v1046
        %1078 = vmatprep.subr.bf16.mxu0 0
        %1079 = vmatpush2.bf16.msra.mxu0 0
        %1080 = vmatprep.subr.bf16.mxu0 0
        %1081 = vmatpush2.bf16.msra.mxu0 0
        %1082 = vmatprep.subr.bf16.mxu0 0
        %1083 = vmatpush2.bf16.msra.mxu0 0
        %1084 = vmatprep.subr.bf16.mxu0 0
        %1085 = vmatpush2.bf16.msra.mxu0 0
        %1086 = vmatprep.subr.bf16.mxu0 0
        %1087 = vmatpush2.bf16.msra.mxu0 0
        %1088 = vmatprep.subr.bf16.mxu0 0
        %1089 = vmatpush2.bf16.msra.mxu0 0
        %1090 = vmatprep.subr.bf16.mxu0 0
        %1091 = vmatpush2.bf16.msra.mxu0 0
        %1092 = vmatprep.subr.bf16.mxu0 0
        %1093 = vmatpush2.bf16.msra.mxu0 0
        %1094 = vmatprep.mubr.bf16.mxu0 0
        %1095 = vmatmul.mubr.bf16.gmra.mxu0 %v522
        %v1096 = vpop.f32.mrf.mxu0
        %v1097 = vadd.f32 0.0, %v1096
        %v1098 = vpop.f32.mrf.mxu0
        %v1099 = vpop.f32.mrf.mxu0
        %v1100 = vadd.f32 0.0, %v1099
        %v1101 = vpop.f32.mrf.mxu0
        %1102 = vmatprep.mubr.bf16.mxu0 0
        %1103 = vmatmul.mubr.bf16.gmra.mxu0 %v523
        %v1104 = vpop.f32.mrf.mxu0
        %v1105 = vadd.f32 0.0, %v1104
        %v1106 = vpop.f32.mrf.mxu0
        %v1107 = vpop.f32.mrf.mxu0
        %v1108 = vadd.f32 0.0, %v1107
        %v1109 = vpop.f32.mrf.mxu0
        %1110 = vmatprep.mubr.bf16.mxu0 0
        %1111 = vmatmul.mubr.bf16.gmra.mxu0 %v524
        %v1112 = vpop.f32.mrf.mxu0
        %v1113 = vadd.f32 0.0, %v1112
        %v1114 = vpop.f32.mrf.mxu0
        %v1115 = vpop.f32.mrf.mxu0
        %v1116 = vadd.f32 0.0, %v1115
        %v1117 = vpop.f32.mrf.mxu0
        %1118 = vmatprep.mubr.bf16.mxu0 0
        %1119 = vmatmul.mubr.bf16.gmra.mxu0 %v525
        %v1120 = vpop.f32.mrf.mxu0
        %v1121 = vadd.f32 0.0, %v1120
        %v1122 = vpop.f32.mrf.mxu0
        %v1123 = vpop.f32.mrf.mxu0
        %v1124 = vadd.f32 0.0, %v1123
        %v1125 = vpop.f32.mrf.mxu0
        %1126 = vmatprep.mubr.bf16.mxu0 0
        %1127 = vmatmul.mubr.bf16.gmra.mxu0 %v526
        %v1128 = vpop.f32.mrf.mxu0
        %v1129 = vadd.f32 0.0, %v1128
        %v1130 = vpop.f32.mrf.mxu0
        %v1131 = vpop.f32.mrf.mxu0
        %v1132 = vadd.f32 0.0, %v1131
        %v1133 = vpop.f32.mrf.mxu0
        %1134 = vmatprep.mubr.bf16.mxu0 0
        %1135 = vmatmul.mubr.bf16.gmra.mxu0 %v527
        %v1136 = vpop.f32.mrf.mxu0
        %v1137 = vadd.f32 0.0, %v1136
        %v1138 = vpop.f32.mrf.mxu0
        %v1139 = vpop.f32.mrf.mxu0
        %v1140 = vadd.f32 0.0, %v1139
        %v1141 = vpop.f32.mrf.mxu0
        %1142 = vmatprep.mubr.bf16.mxu0 0
        %1143 = vmatmul.mubr.bf16.gmra.mxu0 %v528
        %v1144 = vpop.f32.mrf.mxu0
        %v1145 = vadd.f32 0.0, %v1144
        %v1146 = vpop.f32.mrf.mxu0
        %v1147 = vpop.f32.mrf.mxu0
        %v1148 = vadd.f32 0.0, %v1147
        %v1149 = vpop.f32.mrf.mxu0
        %1150 = vmatprep.mubr.bf16.mxu0 0
        %1151 = vmatmul.mubr.bf16.gmra.mxu0 %v529
        %v1152 = vpop.f32.mrf.mxu0
        %v1153 = vadd.f32 0.0, %v1152
        %v1154 = vpop.f32.mrf.mxu0
        %v1155 = vpop.f32.mrf.mxu0
        %v1156 = vadd.f32 0.0, %v1155
        %v1157 = vpop.f32.mrf.mxu0
        %1158 = vdwg.mxu0
        %v1159 = vadd.f32 %v981, %v1097
        %v1160 = vadd.f32 %v982, %v1100
        %v1161 = vadd.f32 %v983, %v1105
        %v1162 = vadd.f32 %v984, %v1108
        %v1163 = vadd.f32 %v985, %v1113
        %v1164 = vadd.f32 %v986, %v1116
        %v1165 = vadd.f32 %v987, %v1121
        %v1166 = vadd.f32 %v988, %v1124
        %v1167 = vadd.f32 %v989, %v1129
        %v1168 = vadd.f32 %v990, %v1132
        %v1169 = vadd.f32 %v991, %v1137
        %v1170 = vadd.f32 %v992, %v1140
        %v1171 = vadd.f32 %v993, %v1145
        %v1172 = vadd.f32 %v994, %v1148
        %v1173 = vadd.f32 %v995, %v1153
        %v1174 = vadd.f32 %v996, %v1156
        %s1175 = scalar_lea.vmem [#allocation7], 128
        %v1176 = vld [vmem:[%s1175] sm:$0xf]
        %v1177 = vld [vmem:[%s1175 + $0x4] sm:$0xf]
        %v1178 = vld [vmem:[%s1175 + $0x8] sm:$0xf]
        %v1179 = vld [vmem:[%s1175 + $0xc] sm:$0xf]
        %v1180 = vld [vmem:[%s1175 + $0x10] sm:$0xf]
        %v1181 = vld [vmem:[%s1175 + $0x14] sm:$0xf]
        %v1182 = vld [vmem:[%s1175 + $0x18] sm:$0xf]
        %v1183 = vld [vmem:[%s1175 + $0x1c] sm:$0xf]
        %v1184 = vld [vmem:[%s1175 + $0x20] sm:$0xf]
        %v1185 = vld [vmem:[%s1175 + $0x24] sm:$0xf]
        %v1186 = vld [vmem:[%s1175 + $0x28] sm:$0xf]
        %v1187 = vld [vmem:[%s1175 + $0x2c] sm:$0xf]
        %v1188 = vld [vmem:[%s1175 + $0x30] sm:$0xf]
        %v1189 = vld [vmem:[%s1175 + $0x34] sm:$0xf]
        %v1190 = vld [vmem:[%s1175 + $0x38] sm:$0xf]
        %v1191 = vld [vmem:[%s1175 + $0x3c] sm:$0xf]
        %v1208 = vunpack.c.l.b16 %v1176
        %v1209 = vunpack.c.l.b16 %v1177
        %v1210 = vunpack.c.l.b16 %v1178
        %v1211 = vunpack.c.l.b16 %v1179
        %v1212 = vunpack.c.l.b16 %v1180
        %v1213 = vunpack.c.l.b16 %v1181
        %v1214 = vunpack.c.l.b16 %v1182
        %v1215 = vunpack.c.l.b16 %v1183
        %v1216 = vunpack.c.l.b16 %v1184
        %v1217 = vunpack.c.l.b16 %v1185
        %v1218 = vunpack.c.l.b16 %v1186
        %v1219 = vunpack.c.l.b16 %v1187
        %v1220 = vunpack.c.l.b16 %v1188
        %v1221 = vunpack.c.l.b16 %v1189
        %v1222 = vunpack.c.l.b16 %v1190
        %v1223 = vunpack.c.l.b16 %v1191
        %v1224 = vpack.c.b16 %v1209, %v1208
        %v1225 = vpack.c.b16 %v1211, %v1210
        %v1226 = vpack.c.b16 %v1213, %v1212
        %v1227 = vpack.c.b16 %v1215, %v1214
        %v1228 = vpack.c.b16 %v1217, %v1216
        %v1229 = vpack.c.b16 %v1219, %v1218
        %v1230 = vpack.c.b16 %v1221, %v1220
        %v1231 = vpack.c.b16 %v1223, %v1222
        %1240 = vmatprep.subr.bf16.mxu0 0
        %1241 = vmatpush1.bf16.msra.mxu0 %v1231
        %1242 = vmatprep.subr.bf16.mxu0 0
        %1243 = vmatpush1.bf16.msra.mxu0 %v1230
        %1244 = vmatprep.subr.bf16.mxu0 0
        %1245 = vmatpush1.bf16.msra.mxu0 %v1229
        %1246 = vmatprep.subr.bf16.mxu0 0
        %1247 = vmatpush1.bf16.msra.mxu0 %v1228
        %1248 = vmatprep.subr.bf16.mxu0 0
        %1249 = vmatpush1.bf16.msra.mxu0 %v1227
        %1250 = vmatprep.subr.bf16.mxu0 0
        %1251 = vmatpush1.bf16.msra.mxu0 %v1226
        %1252 = vmatprep.subr.bf16.mxu0 0
        %1253 = vmatpush1.bf16.msra.mxu0 %v1225
        %1254 = vmatprep.subr.bf16.mxu0 0
        %1255 = vmatpush1.bf16.msra.mxu0 %v1224
        %1256 = vmatprep.subr.bf16.mxu0 0
        %1257 = vmatpush2.bf16.msra.mxu0 0
        %1258 = vmatprep.subr.bf16.mxu0 0
        %1259 = vmatpush2.bf16.msra.mxu0 0
        %1260 = vmatprep.subr.bf16.mxu0 0
        %1261 = vmatpush2.bf16.msra.mxu0 0
        %1262 = vmatprep.subr.bf16.mxu0 0
        %1263 = vmatpush2.bf16.msra.mxu0 0
        %1264 = vmatprep.subr.bf16.mxu0 0
        %1265 = vmatpush2.bf16.msra.mxu0 0
        %1266 = vmatprep.subr.bf16.mxu0 0
        %1267 = vmatpush2.bf16.msra.mxu0 0
        %1268 = vmatprep.subr.bf16.mxu0 0
        %1269 = vmatpush2.bf16.msra.mxu0 0
        %1270 = vmatprep.subr.bf16.mxu0 0
        %1271 = vmatpush2.bf16.msra.mxu0 0
        %1272 = vmatprep.mubr.bf16.mxu0 0
        %1273 = vmatmul.mubr.bf16.gmra.mxu0 %v522
        %v1274 = vpop.f32.mrf.mxu0
        %v1275 = vadd.f32 0.0, %v1274
        %v1276 = vpop.f32.mrf.mxu0
        %v1277 = vpop.f32.mrf.mxu0
        %v1278 = vadd.f32 0.0, %v1277
        %v1279 = vpop.f32.mrf.mxu0
        %1280 = vmatprep.mubr.bf16.mxu0 0
        %1281 = vmatmul.mubr.bf16.gmra.mxu0 %v523
        %v1282 = vpop.f32.mrf.mxu0
        %v1283 = vadd.f32 0.0, %v1282
        %v1284 = vpop.f32.mrf.mxu0
        %v1285 = vpop.f32.mrf.mxu0
        %v1286 = vadd.f32 0.0, %v1285
        %v1287 = vpop.f32.mrf.mxu0
        %1288 = vmatprep.mubr.bf16.mxu0 0
        %1289 = vmatmul.mubr.bf16.gmra.mxu0 %v524
        %v1290 = vpop.f32.mrf.mxu0
        %v1291 = vadd.f32 0.0, %v1290
        %v1292 = vpop.f32.mrf.mxu0
        %v1293 = vpop.f32.mrf.mxu0
        %v1294 = vadd.f32 0.0, %v1293
        %v1295 = vpop.f32.mrf.mxu0
        %1296 = vmatprep.mubr.bf16.mxu0 0
        %1297 = vmatmul.mubr.bf16.gmra.mxu0 %v525
        %v1298 = vpop.f32.mrf.mxu0
        %v1299 = vadd.f32 0.0, %v1298
        %v1300 = vpop.f32.mrf.mxu0
        %v1301 = vpop.f32.mrf.mxu0
        %v1302 = vadd.f32 0.0, %v1301
        %v1303 = vpop.f32.mrf.mxu0
        %1304 = vmatprep.mubr.bf16.mxu0 0
        %1305 = vmatmul.mubr.bf16.gmra.mxu0 %v526
        %v1306 = vpop.f32.mrf.mxu0
        %v1307 = vadd.f32 0.0, %v1306
        %v1308 = vpop.f32.mrf.mxu0
        %v1309 = vpop.f32.mrf.mxu0
        %v1310 = vadd.f32 0.0, %v1309
        %v1311 = vpop.f32.mrf.mxu0
        %1312 = vmatprep.mubr.bf16.mxu0 0
        %1313 = vmatmul.mubr.bf16.gmra.mxu0 %v527
        %v1314 = vpop.f32.mrf.mxu0
        %v1315 = vadd.f32 0.0, %v1314
        %v1316 = vpop.f32.mrf.mxu0
        %v1317 = vpop.f32.mrf.mxu0
        %v1318 = vadd.f32 0.0, %v1317
        %v1319 = vpop.f32.mrf.mxu0
        %1320 = vmatprep.mubr.bf16.mxu0 0
        %1321 = vmatmul.mubr.bf16.gmra.mxu0 %v528
        %v1322 = vpop.f32.mrf.mxu0
        %v1323 = vadd.f32 0.0, %v1322
        %v1324 = vpop.f32.mrf.mxu0
        %v1325 = vpop.f32.mrf.mxu0
        %v1326 = vadd.f32 0.0, %v1325
        %v1327 = vpop.f32.mrf.mxu0
        %1328 = vmatprep.mubr.bf16.mxu0 0
        %1329 = vmatmul.mubr.bf16.gmra.mxu0 %v529
        %v1330 = vpop.f32.mrf.mxu0
        %v1331 = vadd.f32 0.0, %v1330
        %v1332 = vpop.f32.mrf.mxu0
        %v1333 = vpop.f32.mrf.mxu0
        %v1334 = vadd.f32 0.0, %v1333
        %v1335 = vpop.f32.mrf.mxu0
        %1336 = vdwg.mxu0
        %v1337 = vrot.slane %v1275, 1
        %v1338 = vrot.slane %v1278, 1
        %v1339 = vrot.slane %v1283, 1
        %v1340 = vrot.slane %v1286, 1
        %v1341 = vrot.slane %v1291, 1
        %v1342 = vrot.slane %v1294, 1
        %v1343 = vrot.slane %v1299, 1
        %v1344 = vrot.slane %v1302, 1
        %v1345 = vrot.slane %v1307, 1
        %v1346 = vrot.slane %v1310, 1
        %v1347 = vrot.slane %v1315, 1
        %v1348 = vrot.slane %v1318, 1
        %v1349 = vrot.slane %v1323, 1
        %v1350 = vrot.slane %v1326, 1
        %v1351 = vrot.slane %v1331, 1
        %v1352 = vrot.slane %v1334, 1
        %vm1353 = vcmp.lt.s32.totalorder %v531, 7
        %v1354 = vsel %vm1353, %v1351, %v1352
        %v1355 = vsel %vm1353, %v1350, %v1351
        %v1356 = vsel %vm1353, %v1349, %v1350
        %v1357 = vsel %vm1353, %v1348, %v1349
        %v1358 = vsel %vm1353, %v1347, %v1348
        %v1359 = vsel %vm1353, %v1346, %v1347
        %v1360 = vsel %vm1353, %v1345, %v1346
        %v1361 = vsel %vm1353, %v1344, %v1345
        %v1362 = vsel %vm1353, %v1343, %v1344
        %v1363 = vsel %vm1353, %v1342, %v1343
        %v1364 = vsel %vm1353, %v1341, %v1342
        %v1365 = vsel %vm1353, %v1340, %v1341
        %v1366 = vsel %vm1353, %v1339, %v1340
        %v1367 = vsel %vm1353, %v1338, %v1339
        %v1368 = vsel %vm1353, %v1337, %v1338
        %v1369 = vsel %vm1353, %v1352, %v1337
        %vm1370 = vcmp.lt.s32.totalorder %v723, 7
        %vm1371 = vcmp.lt.s32.totalorder %v724, 7
        %vm1372 = vcmp.lt.s32.totalorder %v725, 7
        %vm1373 = vcmp.lt.s32.totalorder %v726, 7
        %vm1374 = vcmp.lt.s32.totalorder %v727, 7
        %vm1375 = vcmp.lt.s32.totalorder %v728, 7
        %vm1376 = vcmp.lt.s32.totalorder %v729, 7
        %vm1377 = vcmp.lt.s32.totalorder %v730, 7
        %vm1378 = vcmp.lt.s32.totalorder %v731, 7
        %vm1379 = vcmp.lt.s32.totalorder %v732, 7
        %vm1380 = vcmp.lt.s32.totalorder %v733, 7
        %vm1381 = vcmp.lt.s32.totalorder %v734, 7
        %vm1382 = vcmp.lt.s32.totalorder %v735, 7
        %vm1383 = vcmp.lt.s32.totalorder %v736, 7
        %vm1384 = vcmp.lt.s32.totalorder %v737, 7
        %vm1385 = vcmp.lt.s32.totalorder %v738, 7
        %v1386 = vsel %vm1370, 1, 0
        %v1387 = vsel %vm1371, 1, 0
        %v1388 = vsel %vm1372, 1, 0
        %v1389 = vsel %vm1373, 1, 0
        %v1390 = vsel %vm1374, 1, 0
        %v1391 = vsel %vm1375, 1, 0
        %v1392 = vsel %vm1376, 1, 0
        %v1393 = vsel %vm1377, 1, 0
        %v1394 = vsel %vm1378, 1, 0
        %v1395 = vsel %vm1379, 1, 0
        %v1396 = vsel %vm1380, 1, 0
        %v1397 = vsel %vm1381, 1, 0
        %v1398 = vsel %vm1382, 1, 0
        %v1399 = vsel %vm1383, 1, 0
        %v1400 = vsel %vm1384, 1, 0
        %v1401 = vsel %vm1385, 1, 0
        %vm1402 = vcmp.eq.s32.totalorder %v1386, 1
        %vm1403 = vcmp.eq.s32.totalorder %v1387, 1
        %vm1404 = vcmp.eq.s32.totalorder %v1388, 1
        %vm1405 = vcmp.eq.s32.totalorder %v1389, 1
        %vm1406 = vcmp.eq.s32.totalorder %v1390, 1
        %vm1407 = vcmp.eq.s32.totalorder %v1391, 1
        %vm1408 = vcmp.eq.s32.totalorder %v1392, 1
        %vm1409 = vcmp.eq.s32.totalorder %v1393, 1
        %vm1410 = vcmp.eq.s32.totalorder %v1394, 1
        %vm1411 = vcmp.eq.s32.totalorder %v1395, 1
        %vm1412 = vcmp.eq.s32.totalorder %v1396, 1
        %vm1413 = vcmp.eq.s32.totalorder %v1397, 1
        %vm1414 = vcmp.eq.s32.totalorder %v1398, 1
        %vm1415 = vcmp.eq.s32.totalorder %v1399, 1
        %vm1416 = vcmp.eq.s32.totalorder %v1400, 1
        %vm1417 = vcmp.eq.s32.totalorder %v1401, 1
        %v1418 = vsel %vm1402, %v1368, 0.0
        %v1419 = vsel %vm1403, %v1367, 0.0
        %v1420 = vsel %vm1404, %v1366, 0.0
        %v1421 = vsel %vm1405, %v1365, 0.0
        %v1422 = vsel %vm1406, %v1364, 0.0
        %v1423 = vsel %vm1407, %v1363, 0.0
        %v1424 = vsel %vm1408, %v1362, 0.0
        %v1425 = vsel %vm1409, %v1361, 0.0
        %v1426 = vsel %vm1410, %v1360, 0.0
        %v1427 = vsel %vm1411, %v1359, 0.0
        %v1428 = vsel %vm1412, %v1358, 0.0
        %v1429 = vsel %vm1413, %v1357, 0.0
        %v1430 = vsel %vm1414, %v1356, 0.0
        %v1431 = vsel %vm1415, %v1355, 0.0
        %v1432 = vsel %vm1416, %v1354, 0.0
        %v1433 = vsel %vm1417, %v1369, 0.0
        %v1434 = vadd.f32 %v1159, %v1418
        %v1435 = vadd.f32 %v1160, %v1419
        %v1436 = vadd.f32 %v1161, %v1420
        %v1437 = vadd.f32 %v1162, %v1421
        %v1438 = vadd.f32 %v1163, %v1422
        %v1439 = vadd.f32 %v1164, %v1423
        %v1440 = vadd.f32 %v1165, %v1424
        %v1441 = vadd.f32 %v1166, %v1425
        %v1442 = vadd.f32 %v1167, %v1426
        %v1443 = vadd.f32 %v1168, %v1427
        %v1444 = vadd.f32 %v1169, %v1428
        %v1445 = vadd.f32 %v1170, %v1429
        %v1446 = vadd.f32 %v1171, %v1430
        %v1447 = vadd.f32 %v1172, %v1431
        %v1448 = vadd.f32 %v1173, %v1432
        %v1449 = vadd.f32 %v1174, %v1433
        %v1450 = vlaneseq
        %v1451 = vshrl.u32 %v1450, 7
        %v1452 = vsub.s32 2, %v1451
        %v1453 = vrot.slane %v264, %v1452
        %v1454 = vmul.f32 %v1434, %v1453
        %v1455 = vmul.f32 %v1435, %v1453
        %v1456 = vmul.f32 %v1436, %v1453
        %v1457 = vmul.f32 %v1437, %v1453
        %v1458 = vmul.f32 %v1438, %v1453
        %v1459 = vmul.f32 %v1439, %v1453
        %v1460 = vmul.f32 %v1440, %v1453
        %v1461 = vmul.f32 %v1441, %v1453
        %v1462 = vmul.f32 %v1442, %v1453
        %v1463 = vmul.f32 %v1443, %v1453
        %v1464 = vmul.f32 %v1444, %v1453
        %v1465 = vmul.f32 %v1445, %v1453
        %v1466 = vmul.f32 %v1446, %v1453
        %v1467 = vmul.f32 %v1447, %v1453
        %v1468 = vmul.f32 %v1448, %v1453
        %v1469 = vmul.f32 %v1449, %v1453
        %v1470 = vlaneseq
        %v1471 = vshrl.u32 %v1470, 7
        %v1472 = vsub.s32 3, %v1471
        %v1473 = vrot.slane %v264, %v1472
        %v1474 = vadd.f32 %v1454, %v1473
        %v1475 = vadd.f32 %v1455, %v1473
        %v1476 = vadd.f32 %v1456, %v1473
        %v1477 = vadd.f32 %v1457, %v1473
        %v1478 = vadd.f32 %v1458, %v1473
        %v1479 = vadd.f32 %v1459, %v1473
        %v1480 = vadd.f32 %v1460, %v1473
        %v1481 = vadd.f32 %v1461, %v1473
        %v1482 = vadd.f32 %v1462, %v1473
        %v1483 = vadd.f32 %v1463, %v1473
        %v1484 = vadd.f32 %v1464, %v1473
        %v1485 = vadd.f32 %v1465, %v1473
        %v1486 = vadd.f32 %v1466, %v1473
        %v1487 = vadd.f32 %v1467, %v1473
        %v1488 = vadd.f32 %v1468, %v1473
        %v1489 = vadd.f32 %v1469, %v1473
        %v1490 = vadd.f32 %v1474, %v248
        %v1491 = vadd.f32 %v1475, %v249
        %v1492 = vadd.f32 %v1476, %v250
        %v1493 = vadd.f32 %v1477, %v251
        %v1494 = vadd.f32 %v1478, %v252
        %v1495 = vadd.f32 %v1479, %v253
        %v1496 = vadd.f32 %v1480, %v254
        %v1497 = vadd.f32 %v1481, %v255
        %v1498 = vadd.f32 %v1482, %v256
        %v1499 = vadd.f32 %v1483, %v257
        %v1500 = vadd.f32 %v1484, %v258
        %v1501 = vadd.f32 %v1485, %v259
        %v1502 = vadd.f32 %v1486, %v260
        %v1503 = vadd.f32 %v1487, %v261
        %v1504 = vadd.f32 %v1488, %v262
        %v1505 = vadd.f32 %v1489, %v263
        %v1506 = vmul.f32 %v1490, 0.005
        %v1507 = vmul.f32 %v1491, 0.005
        %v1508 = vmul.f32 %v1492, 0.005
        %v1509 = vmul.f32 %v1493, 0.005
        %v1510 = vmul.f32 %v1494, 0.005
        %v1511 = vmul.f32 %v1495, 0.005
        %v1512 = vmul.f32 %v1496, 0.005
        %v1513 = vmul.f32 %v1497, 0.005
        %v1514 = vmul.f32 %v1498, 0.005
        %v1515 = vmul.f32 %v1499, 0.005
        %v1516 = vmul.f32 %v1500, 0.005
        %v1517 = vmul.f32 %v1501, 0.005
        %v1518 = vmul.f32 %v1502, 0.005
        %v1519 = vmul.f32 %v1503, 0.005
        %v1520 = vmul.f32 %v1504, 0.005
        %v1521 = vmul.f32 %v1505, 0.005
        %v1522 = vadd.f32 %v1506, 1.0
        %v1523 = vadd.f32 %v1507, 1.0
        %v1524 = vadd.f32 %v1508, 1.0
        %v1525 = vadd.f32 %v1509, 1.0
        %v1526 = vadd.f32 %v1510, 1.0
        %v1527 = vadd.f32 %v1511, 1.0
        %v1528 = vadd.f32 %v1512, 1.0
        %v1529 = vadd.f32 %v1513, 1.0
        %v1530 = vadd.f32 %v1514, 1.0
        %v1531 = vadd.f32 %v1515, 1.0
        %v1532 = vadd.f32 %v1516, 1.0
        %v1533 = vadd.f32 %v1517, 1.0
        %v1534 = vadd.f32 %v1518, 1.0
        %v1535 = vadd.f32 %v1519, 1.0
        %v1536 = vadd.f32 %v1520, 1.0
        %v1537 = vadd.f32 %v1521, 1.0
        %v1538 = vmul.f32 %v1490, %v1522
        %v1539 = vmul.f32 %v1491, %v1523
        %v1540 = vmul.f32 %v1492, %v1524
        %v1541 = vmul.f32 %v1493, %v1525
        %v1542 = vmul.f32 %v1494, %v1526
        %v1543 = vmul.f32 %v1495, %v1527
        %v1544 = vmul.f32 %v1496, %v1528
        %v1545 = vmul.f32 %v1497, %v1529
        %v1546 = vmul.f32 %v1498, %v1530
        %v1547 = vmul.f32 %v1499, %v1531
        %v1548 = vmul.f32 %v1500, %v1532
        %v1549 = vmul.f32 %v1501, %v1533
        %v1550 = vmul.f32 %v1502, %v1534
        %v1551 = vmul.f32 %v1503, %v1535
        %v1552 = vmul.f32 %v1504, %v1536
        %v1553 = vmul.f32 %v1505, %v1537
        %1554 = vst [vmem:[%s244] sm:$0xff] %v1538
        %1555 = vst [vmem:[%s244 + $0x8] sm:$0xff] %v1539
        %1556 = vst [vmem:[%s244 + $0x10] sm:$0xff] %v1540
        %1557 = vst [vmem:[%s244 + $0x18] sm:$0xff] %v1541
        %1558 = vst [vmem:[%s244 + $0x20] sm:$0xff] %v1542
        %1559 = vst [vmem:[%s244 + $0x28] sm:$0xff] %v1543
        %1560 = vst [vmem:[%s244 + $0x30] sm:$0xff] %v1544
        %1561 = vst [vmem:[%s244 + $0x38] sm:$0xff] %v1545
        %1562 = vst [vmem:[%s244 + $0x40] sm:$0xff] %v1546
        %1563 = vst [vmem:[%s244 + $0x48] sm:$0xff] %v1547
        %1564 = vst [vmem:[%s244 + $0x50] sm:$0xff] %v1548
        %1565 = vst [vmem:[%s244 + $0x58] sm:$0xff] %v1549
        %1566 = vst [vmem:[%s244 + $0x60] sm:$0xff] %v1550
        %1567 = vst [vmem:[%s244 + $0x68] sm:$0xff] %v1551
        %1568 = vst [vmem:[%s244 + $0x70] sm:$0xff] %v1552
        %1569 = vst [vmem:[%s244 + $0x78] sm:$0xff] %v1553
        %s1570 = sand.u32 %s119, 1
        %s1571 = scalar_lea.sflag [#allocation4], %s1570
        %s1572 = sand.u32 %s119, 1
        %s1573 = smul.addr %s1572, 128
        %s1574 = scalar_lea.vmem [#allocation8], %s1573
        // Predicated region
        $region49: #{tpu_custom_call.1} parent=35 // pred_check
          %p1575 = pneg %p129
        $region50: #{tpu_custom_call.1} parent=35 // pred_check_branch
          %1577 = sbr.rel (%p1575) target = $region52
        $region51: #{tpu_custom_call.1} parent=35 // pred_region
          %s1578 = smul.u32 16, %s22
          %s1580 = ssub.s32 2048, 2048
          %1581 = vsyncadd %s1571, %s1580
          %s1582 = smul.addr %s1578, 128
          %s1583 = scalar_lea.hbm %s4, %s1582
          %s1584 = sshll.u32 %s1574, 4
          %s1585 = int_to_ptr.vmem [resolvable:$true] %s1584
          %1590 = dma.vmem_to_hbm [thread:$0]  %s1585, 2048, %s1583, %s1571, 128, 128, 8
        $region52: #{tpu_custom_call.1} parent=35 // pred_fallthru
          _
      $region36: #{tpu_custom_call.1} parent=5 // pred_fallthru
        _
      %p1591 = scmp.le.s32.totalorder 2, %s17
      // Predicated region
      $region53: #{tpu_custom_call.1} parent=5 // pred_check
        %p1592 = pneg %p1591
      $region54: #{tpu_custom_call.1} parent=5 // pred_check_branch
        %1594 = sbr.rel (%p1592) target = $region56
      $region55: #{tpu_custom_call.1} parent=5 // pred_region
        %s1595 = ssub.s32 %s17, 2
        // Predicated region
        $region57: #{tpu_custom_call.1} parent=55 // pred_check
          %p1596 = pneg %p135
        $region58: #{tpu_custom_call.1} parent=55 // pred_check_branch
          %1598 = sbr.rel (%p1596) target = $region60
        $region59: #{tpu_custom_call.1} parent=55 // pred_region
          %s1599 = sand.u32 %s120, 1
          %s1600 = scalar_lea.sflag [#allocation4], %s1599
          %s1601 = sand.u32 %s120, 1
          %s1602 = smul.addr %s1601, 128
          %s1603 = scalar_lea.vmem [#allocation8], %s1602
          %1604 = dma.done %s1600, 2048
        $region60: #{tpu_custom_call.1} parent=55 // pred_fallthru
          _
      $region56: #{tpu_custom_call.1} parent=5 // pred_fallthru
        _
    $region6: #{tpu_custom_call.1} parent=1 // loop_footer
      %s21 = sadd.s32 1, %s17
    $region7: #{tpu_custom_call.1} parent=1 // loop_footer_branch
      %16 = sbr.rel target = $region3
    $region8: #{tpu_custom_call.1} parent=1 // loop_exit
      _
    %1605 = vsyncpa [#allocation3], 1
    %s1606 = scalar_lea.sflag [#allocation3], 1
    %1607 = vsyncpa %s1606, 1
    %1608 = vsyncpa [#allocation6], 1
    %1609 = vsyncpa [#allocation4], 1
    %s1610 = scalar_lea.sflag [#allocation4], 1
    %1611 = vsyncpa %s1610, 1

</llo_original>
